<compile_context>
chip_gen: v7x
topology: tpu7x:2x2x1
jax: 0.10.0
libtpu: 0.0.40
codegen_flags: <defaults>
</compile_context>

<pallas_src>
import jax
import jax.numpy as jnp
import numpy as np
from jax.experimental import pallas as pl
from jax.experimental.pallas import tpu as pltpu

OUT1 = 16          # conv1 out channels
OUT2 = 32          # conv2 out channels
H = W = 16         # input spatial (two 2x2 pools -> 4x4, fc in = 32*4*4 = 512)
K = 5              # kernel size
PAD = 2
NCLS = 10
NCLS_PAD = 128     # lane-dense output width
IMW = W + 2 * PAD  # 20 padded width
K1 = 128           # conv1 im2col lanes (5*20=100 padded to 128)


def _round_up(n, m):
    return (n + m - 1) // m * m


def cnn_kernel(xim_ref, w1_ref, b1_ref, w2_ref, b2_ref, wfc_ref, bfc_ref, o_ref):
    """One batch block per grid step.

    xim_ref: (BBLK, 16, 128)  conv1 im2col.  row = h_parity*8 + h_pool
                              (h = 2*h_pool + h_parity); lane = ki*20 + wi
                              (lanes 100..127 zero).
    w1_ref : (128, 256)       conv1 Toeplitz. cols = w_par*128 + w_pool*16 + c1
    b1_ref : (1, 256)
    w2_ref : (640, 256)       conv2 Toeplitz. rows = ki*128 + w_in*16 + c1,
                              cols = w_par*128 + w_pool*32 + c2
    b2_ref : (1, 256)
    wfc_ref: (512, 128)       fc weights, rows in (h_pool2, w_pool2, c2) order,
                              cols zero-padded past 10.
    bfc_ref: (1, 128)
    o_ref  : (BBLK, 128)      lane-dense logits block
    """
    BB = xim_ref.shape[0]

    # ---- conv1: single MXU matmul (BB*16, 128) @ (128, 256) ----
    x = xim_ref[...].reshape(BB * 16, K1)
    a1 = jnp.dot(x, w1_ref[...], preferred_element_type=jnp.float32) + b1_ref[...]
    a1 = jnp.maximum(a1, 0.0)                         # rows=(b,hpar,hp) cols=(wpar,wp,c1)

    # ---- maxpool1: h over aligned 8-row parity blocks, w over 128-lane halves ----
    r1 = a1.reshape(BB, 2, 8, 2 * 8 * OUT1)
    h1 = jnp.maximum(r1[:, 0], r1[:, 1])              # (BB, 8, 256)
    p1 = jnp.maximum(h1[..., :128], h1[..., 128:])    # (BB, 8, 128) rows=(b,hp) cols=(wp,c1)

    # ---- conv2: fuse 5 height taps into one (BB*8, 640) @ (640, 256) matmul ----
    zh = jnp.zeros((BB, PAD, 8 * OUT1), jnp.float32)
    p1h = jnp.concatenate([zh, p1, zh], axis=1)       # (BB, 12, 128), h-padded
    lhs2 = jnp.concatenate([p1h[:, ki:ki + 8, :] for ki in range(K)], axis=-1)
    lhs2 = lhs2.reshape(BB * 8, K * 8 * OUT1)         # (BB*8, 640)
    a2 = jnp.dot(lhs2, w2_ref[...], preferred_element_type=jnp.float32) + b2_ref[...]
    a2 = jnp.maximum(a2, 0.0)                         # (BB*8, 256) cols=(wpar2,wp2,c2)

    # ---- maxpool2: w over lane halves, h over adjacent row pairs ----
    wm2 = jnp.maximum(a2[:, :128], a2[:, 128:])       # (BB*8, 128) cols=(wp2,c2)
    r2 = wm2.reshape(BB, 4, 2, 4 * OUT2)
    p2 = jnp.maximum(r2[:, :, 0], r2[:, :, 1])        # (BB, 4, 128) rows=(b,hp2)

    # ---- fc: (BB, 512) @ (512, 128) + bias, lane-dense store ----
    flat = p2.reshape(BB, 4 * 4 * OUT2)               # flatten order (hp2, wp2, c2)
    o_ref[...] = jnp.dot(flat, wfc_ref[...],
                         preferred_element_type=jnp.float32) + bfc_ref[...]


def _conv1_weight(w1):
    """(128, 256): row = ki*20 + wi (pad to 128), col = wpar*128 + wp*16 + c1."""
    S = (np.arange(IMW)[None, :, None]
         == np.arange(W)[None, None, :] + np.arange(K)[:, None, None]
         ).astype(np.float32)                                  # (K, 20, 16): S[kj, wi, w]
    T = jnp.einsum('jiw,ckj->kiwc', jnp.asarray(S), w1[:, 0, :, :])   # (ki, wi, w, c1)
    T = T.reshape(K, IMW, 8, 2, OUT1).transpose(0, 1, 3, 2, 4)        # (ki, wi, par, wp, c1)
    T = T.reshape(K * IMW, 2 * 8 * OUT1)                              # (100, 256)
    return jnp.pad(T, ((0, K1 - K * IMW), (0, 0)))                    # (128, 256)


def _conv2_weight(w2):
    """(640, 256): row = ki*128 + w_in*16 + c1, col = wpar*128 + wp2*32 + c2."""
    S = (np.arange(8)[None, :, None]
         == np.arange(8)[None, None, :] + np.arange(K)[:, None, None] - PAD
         ).astype(np.float32)                                  # (K, 8, 8): S[kj, wi, wo]
    T = jnp.einsum('jiw,ockj->kicwo', jnp.asarray(S), w2)      # (ki, wi, c1, wo, c2)
    T = T.reshape(K, 8, OUT1, 4, 2, OUT2).transpose(0, 1, 2, 4, 3, 5)  # (ki, wi, c1, par, wp2, c2)
    return T.reshape(K * 8 * OUT1, 2 * 4 * OUT2)               # (640, 256)


def _tile_config():
    """Per-chip (batch block, vmem limit)."""
    kind = ""
    try:
        kind = jax.devices()[0].device_kind.lower()
    except Exception:
        pass
    if "v7" in kind:                       # 64 MiB VMEM / TC, 2 TCs: keep blocks modest
        return 128, 48 * 1024 * 1024
    if "v5" in kind or "v6" in kind:       # 128 MiB VMEM: amortize per-step overhead
        return 256, 96 * 1024 * 1024
    return 128, None                       # unknown hw: conservative defaults


def cnn_forward(x, w1, b1, w2, b2, wfc, bfc, block_b=None):
    """x: (B, 1, 16, 16) float32 (NCHW, like the PyTorch module)."""
    B = x.shape[0]
    auto_b, vmem_limit = _tile_config()
    if block_b is None:
        block_b = auto_b
    BBLK = min(_round_up(block_b, 8), _round_up(B, 8))      # multiple of 8
    Bp = _round_up(B, BBLK)

    # glue: conv1 im2col built host-side (layout only), lane-dense + (8,128)-clean.
    xpad = jnp.pad(x[:, 0], ((0, Bp - B), (PAD, PAD), (PAD, PAD)))     # (Bp, 20, 20)
    h_order = (2 * np.arange(8)[None, :] + np.arange(2)[:, None]).reshape(-1)  # parity-major h
    slabs = [xpad[:, h_order + ki, :] for ki in range(K)]              # 5 x (Bp, 16, 20)
    xim = jnp.concatenate(slabs, axis=-1)                              # (Bp, 16, 100)
    xim = jnp.pad(xim, ((0, 0), (0, 0), (0, K1 - K * IMW)))            # (Bp, 16, 128)

    # glue: host-side weight re-layouts (done once).
    w1big = _conv1_weight(w1)                               # (128, 256)
    b1r = jnp.tile(b1, 2 * 8).reshape(1, 2 * 8 * OUT1)      # (1, 256), c1 fastest
    w2big = _conv2_weight(w2)                               # (640, 256)
    b2r = jnp.tile(b2, 2 * 4).reshape(1, 2 * 4 * OUT2)      # (1, 256), c2 fastest
    # fc columns (PyTorch order c*16+h*4+w) -> (h, w, c) flatten order, lane-padded
    wfc_hwc = wfc.reshape(NCLS, OUT2, 4, 4).transpose(0, 2, 3, 1).reshape(NCLS, -1)
    wfc_pad = jnp.zeros((OUT2 * 16, NCLS_PAD), jnp.float32).at[:, :NCLS].set(wfc_hwc.T)
    bfc_pad = jnp.zeros((1, NCLS_PAD), jnp.float32).at[:, :NCLS].set(bfc.reshape(1, NCLS))

    out = pl.pallas_call(
        cnn_kernel,
        out_shape=jax.ShapeDtypeStruct((Bp, NCLS_PAD), jnp.float32),
        grid=(Bp // BBLK,),
        in_specs=[
            pl.BlockSpec((BBLK, 16, K1), lambda b: (b, 0, 0)),
            pl.BlockSpec((K1, 2 * 8 * OUT1), lambda b: (0, 0)),
            pl.BlockSpec((1, 2 * 8 * OUT1), lambda b: (0, 0)),
            pl.BlockSpec((K * 8 * OUT1, 2 * 4 * OUT2), lambda b: (0, 0)),
            pl.BlockSpec((1, 2 * 4 * OUT2), lambda b: (0, 0)),
            pl.BlockSpec((OUT2 * 16, NCLS_PAD), lambda b: (0, 0)),
            pl.BlockSpec((1, NCLS_PAD), lambda b: (0, 0)),
        ],
        out_specs=pl.BlockSpec((BBLK, NCLS_PAD), lambda b: (b, 0)),
        compiler_params=pltpu.CompilerParams(
            dimension_semantics=("parallel",),      # safe: each step owns its output block
            vmem_limit_bytes=vmem_limit),
    )(xim, w1big, b1r, w2big, b2r, wfc_pad, bfc_pad)
    return out[:B, :NCLS]


def cnn_reference(x, w1, b1, w2, b2, wfc, bfc):
    """Plain-JAX reference matching torch semantics (NCHW)."""
    dn = ('NCHW', 'OIHW', 'NCHW')
    prec = jax.lax.Precision.HIGHEST
    z1 = jax.lax.conv_general_dilated(x, w1, (1, 1), ((PAD, PAD), (PAD, PAD)),
                                      dimension_numbers=dn, precision=prec)
    a1 = jnp.maximum(z1 + b1[None, :, None, None], 0.0)
    p1 = jax.lax.reduce_window(a1, -jnp.inf, jax.lax.max,
                               (1, 1, 2, 2), (1, 1, 2, 2), 'VALID')
    z2 = jax.lax.conv_general_dilated(p1, w2, (1, 1), ((PAD, PAD), (PAD, PAD)),
                                      dimension_numbers=dn, precision=prec)
    a2 = jnp.maximum(z2 + b2[None, :, None, None], 0.0)
    p2 = jax.lax.reduce_window(a2, -jnp.inf, jax.lax.max,
                               (1, 1, 2, 2), (1, 1, 2, 2), 'VALID')
    flat = p2.reshape(p2.shape[0], -1)
    return jnp.dot(flat, wfc.T, precision=prec) + bfc[None, :]


if __name__ == "__main__":
    key = jax.random.PRNGKey(0)
    kx, k1, k2, k3, k4, k5, k6 = jax.random.split(key, 7)

    B = 2
    x = jax.random.normal(kx, (B, 1, H, W), jnp.float32)

    # deterministic PyTorch-default-style init: U(-1/sqrt(fan_in), 1/sqrt(fan_in))
    def uinit(k, shape, fan_in):
        bound = 1.0 / np.sqrt(fan_in)
        return jax.random.uniform(k, shape, jnp.float32, -bound, bound)

    w1 = uinit(k1, (OUT1, 1, K, K), 1 * K * K)
    b1 = uinit(k2, (OUT1,), 1 * K * K)
    w2 = uinit(k3, (OUT2, OUT1, K, K), OUT1 * K * K)
    b2 = uinit(k4, (OUT2,), OUT1 * K * K)
    wfc = uinit(k5, (NCLS, OUT2 * 4 * 4), OUT2 * 4 * 4)
    bfc = uinit(k6, (NCLS,), OUT2 * 4 * 4)

    out = cnn_forward(x, w1, b1, w2, b2, wfc, bfc)
    out = jax.block_until_ready(out)

    ref = cnn_reference(x, w1, b1, w2, b2, wfc, bfc)
    np.testing.assert_allclose(np.asarray(out), np.asarray(ref),
                               rtol=1e-4, atol=1e-4)
    print("KERNEL_OK")
</pallas_src>

<mosaic_0001>
module attributes {stable_mosaic.version = 11 : i64} {
  func.func @cnn_kernel(%arg0: i32, %arg1: memref<8x16x128xf32, #tpu.memory_space<vmem>>, %arg2: memref<128x256xf32, #tpu.memory_space<vmem>>, %arg3: memref<1x256xf32, #tpu.memory_space<vmem>>, %arg4: memref<640x256xf32, #tpu.memory_space<vmem>>, %arg5: memref<1x256xf32, #tpu.memory_space<vmem>>, %arg6: memref<512x128xf32, #tpu.memory_space<vmem>>, %arg7: memref<1x128xf32, #tpu.memory_space<vmem>>, %arg8: memref<8x128xf32, #tpu.memory_space<vmem>>) attributes {dimension_semantics = [#tpu.dimension_semantics<parallel>], iteration_bounds = array<i64: 1>, scalar_prefetch = 0 : i64, scratch_operands = 0 : i64, tpu.core_type = #tpu.core_type<tc>, window_params = [{transform_indices = @transform_0, window_bounds = array<i64: 8, 16, 128>}, {pipeline_mode = #tpu.pipeline_mode<synchronous>, transform_indices = @transform_1, window_bounds = array<i64: 128, 256>}, {pipeline_mode = #tpu.pipeline_mode<synchronous>, transform_indices = @transform_2, window_bounds = array<i64: 1, 256>}, {pipeline_mode = #tpu.pipeline_mode<synchronous>, transform_indices = @transform_3, window_bounds = array<i64: 640, 256>}, {pipeline_mode = #tpu.pipeline_mode<synchronous>, transform_indices = @transform_4, window_bounds = array<i64: 1, 256>}, {pipeline_mode = #tpu.pipeline_mode<synchronous>, transform_indices = @transform_5, window_bounds = array<i64: 512, 128>}, {pipeline_mode = #tpu.pipeline_mode<synchronous>, transform_indices = @transform_6, window_bounds = array<i64: 1, 128>}, {transform_indices = @transform_7, window_bounds = array<i64: 8, 128>}]} {
    %c0 = arith.constant 0 : index
    %c0_0 = arith.constant 0 : index
    %c0_1 = arith.constant 0 : index
    %0 = vector.load %arg1[%c0, %c0_0, %c0_1] : memref<8x16x128xf32, #tpu.memory_space<vmem>>, vector<8x16x128xf32>
    %1 = vector.shape_cast %0 : vector<8x16x128xf32> to vector<128x128xf32>
    %c0_2 = arith.constant 0 : index
    %c0_3 = arith.constant 0 : index
    %2 = vector.load %arg2[%c0_2, %c0_3] : memref<128x256xf32, #tpu.memory_space<vmem>>, vector<128x256xf32>
    %cst = arith.constant dense<0.000000e+00> : vector<128x256xf32>
    %3 = tpu.matmul %1, %2, %cst {dimension_numbers = #tpu.dot_dimension_numbers<[1], [0], [0], [1], [0, 0, 1, 1], [], []>} : vector<128x128xf32>, vector<128x256xf32>, vector<128x256xf32> -> vector<128x256xf32>
    %c0_4 = arith.constant 0 : index
    %c0_5 = arith.constant 0 : index
    %4 = vector.load %arg3[%c0_4, %c0_5] : memref<1x256xf32, #tpu.memory_space<vmem>>, vector<1x256xf32>
    %5 = vector.broadcast %4 : vector<1x256xf32> to vector<128x256xf32>
    %6 = arith.addf %3, %5 : vector<128x256xf32>
    %cst_6 = arith.constant 0.000000e+00 : f32
    %7 = vector.broadcast %cst_6 : f32 to vector<128x256xf32>
    %8 = arith.maximumf %6, %7 : vector<128x256xf32>
    %9 = vector.shape_cast %8 : vector<128x256xf32> to vector<8x2x8x256xf32>
    %10 = vector.extract_strided_slice %9 {offsets = [0, 0, 0, 0], sizes = [8, 1, 8, 256], strides = [1, 1, 1, 1]} : vector<8x2x8x256xf32> to vector<8x1x8x256xf32>
    %11 = vector.shape_cast %10 : vector<8x1x8x256xf32> to vector<8x8x256xf32>
    %12 = vector.extract_strided_slice %9 {offsets = [0, 1, 0, 0], sizes = [8, 1, 8, 256], strides = [1, 1, 1, 1]} : vector<8x2x8x256xf32> to vector<8x1x8x256xf32>
    %13 = vector.shape_cast %12 : vector<8x1x8x256xf32> to vector<8x8x256xf32>
    %14 = arith.maximumf %11, %13 : vector<8x8x256xf32>
    %15 = vector.extract_strided_slice %14 {offsets = [0, 0, 0], sizes = [8, 8, 128], strides = [1, 1, 1]} : vector<8x8x256xf32> to vector<8x8x128xf32>
    %16 = vector.extract_strided_slice %14 {offsets = [0, 0, 128], sizes = [8, 8, 128], strides = [1, 1, 1]} : vector<8x8x256xf32> to vector<8x8x128xf32>
    %17 = arith.maximumf %15, %16 : vector<8x8x128xf32>
    %cst_7 = arith.constant 0.000000e+00 : f32
    %18 = vector.broadcast %cst_7 : f32 to vector<8x2x128xf32>
    %19 = tpu.concatenate %18, %17, %18 in 1 : vector<8x2x128xf32>, vector<8x8x128xf32>, vector<8x2x128xf32> -> vector<8x12x128xf32>
    %20 = vector.extract_strided_slice %19 {offsets = [0, 0, 0], sizes = [8, 8, 128], strides = [1, 1, 1]} : vector<8x12x128xf32> to vector<8x8x128xf32>
    %21 = vector.extract_strided_slice %19 {offsets = [0, 1, 0], sizes = [8, 8, 128], strides = [1, 1, 1]} : vector<8x12x128xf32> to vector<8x8x128xf32>
    %22 = vector.extract_strided_slice %19 {offsets = [0, 2, 0], sizes = [8, 8, 128], strides = [1, 1, 1]} : vector<8x12x128xf32> to vector<8x8x128xf32>
    %23 = vector.extract_strided_slice %19 {offsets = [0, 3, 0], sizes = [8, 8, 128], strides = [1, 1, 1]} : vector<8x12x128xf32> to vector<8x8x128xf32>
    %24 = vector.extract_strided_slice %19 {offsets = [0, 4, 0], sizes = [8, 8, 128], strides = [1, 1, 1]} : vector<8x12x128xf32> to vector<8x8x128xf32>
    %25 = tpu.concatenate %20, %21, %22, %23, %24 in 2 : vector<8x8x128xf32>, vector<8x8x128xf32>, vector<8x8x128xf32>, vector<8x8x128xf32>, vector<8x8x128xf32> -> vector<8x8x640xf32>
    %26 = vector.shape_cast %25 : vector<8x8x640xf32> to vector<64x640xf32>
    %c0_8 = arith.constant 0 : index
    %c0_9 = arith.constant 0 : index
    %27 = vector.load %arg4[%c0_8, %c0_9] : memref<640x256xf32, #tpu.memory_space<vmem>>, vector<640x256xf32>
    %cst_10 = arith.constant dense<0.000000e+00> : vector<64x256xf32>
    %28 = tpu.matmul %26, %27, %cst_10 {dimension_numbers = #tpu.dot_dimension_numbers<[1], [0], [0], [1], [0, 0, 1, 1], [], []>} : vector<64x640xf32>, vector<640x256xf32>, vector<64x256xf32> -> vector<64x256xf32>
    %c0_11 = arith.constant 0 : index
    %c0_12 = arith.constant 0 : index
    %29 = vector.load %arg5[%c0_11, %c0_12] : memref<1x256xf32, #tpu.memory_space<vmem>>, vector<1x256xf32>
    %30 = vector.broadcast %29 : vector<1x256xf32> to vector<64x256xf32>
    %31 = arith.addf %28, %30 : vector<64x256xf32>
    %cst_13 = arith.constant 0.000000e+00 : f32
    %32 = vector.broadcast %cst_13 : f32 to vector<64x256xf32>
    %33 = arith.maximumf %31, %32 : vector<64x256xf32>
    %34 = vector.extract_strided_slice %33 {offsets = [0, 0], sizes = [64, 128], strides = [1, 1]} : vector<64x256xf32> to vector<64x128xf32>
    %35 = vector.extract_strided_slice %33 {offsets = [0, 128], sizes = [64, 128], strides = [1, 1]} : vector<64x256xf32> to vector<64x128xf32>
    %36 = arith.maximumf %34, %35 : vector<64x128xf32>
    %37 = vector.shape_cast %36 : vector<64x128xf32> to vector<8x4x2x128xf32>
    %38 = vector.extract_strided_slice %37 {offsets = [0, 0, 0, 0], sizes = [8, 4, 1, 128], strides = [1, 1, 1, 1]} : vector<8x4x2x128xf32> to vector<8x4x1x128xf32>
    %39 = vector.shape_cast %38 : vector<8x4x1x128xf32> to vector<8x4x128xf32>
    %40 = vector.extract_strided_slice %37 {offsets = [0, 0, 1, 0], sizes = [8, 4, 1, 128], strides = [1, 1, 1, 1]} : vector<8x4x2x128xf32> to vector<8x4x1x128xf32>
    %41 = vector.shape_cast %40 : vector<8x4x1x128xf32> to vector<8x4x128xf32>
    %42 = arith.maximumf %39, %41 : vector<8x4x128xf32>
    %43 = vector.shape_cast %42 : vector<8x4x128xf32> to vector<8x512xf32>
    %c0_14 = arith.constant 0 : index
    %c0_15 = arith.constant 0 : index
    %44 = vector.load %arg6[%c0_14, %c0_15] : memref<512x128xf32, #tpu.memory_space<vmem>>, vector<512x128xf32>
    %cst_16 = arith.constant dense<0.000000e+00> : vector<8x128xf32>
    %45 = tpu.matmul %43, %44, %cst_16 {dimension_numbers = #tpu.dot_dimension_numbers<[1], [0], [0], [1], [0, 0, 1, 1], [], []>} : vector<8x512xf32>, vector<512x128xf32>, vector<8x128xf32> -> vector<8x128xf32>
    %c0_17 = arith.constant 0 : index
    %c0_18 = arith.constant 0 : index
    %46 = vector.load %arg7[%c0_17, %c0_18] : memref<1x128xf32, #tpu.memory_space<vmem>>, vector<1x128xf32>
    %47 = vector.broadcast %46 : vector<1x128xf32> to vector<8x128xf32>
    %48 = arith.addf %45, %47 : vector<8x128xf32>
    %c0_19 = arith.constant 0 : index
    %c0_20 = arith.constant 0 : index
    %49 = vector.load %arg8[%c0_19, %c0_20] : memref<8x128xf32, #tpu.memory_space<vmem>>, vector<8x128xf32>
    tpu.vector_store %arg8[%c0_19, %c0_20], %48 {strides = array<i32>} : memref<8x128xf32, #tpu.memory_space<vmem>>, vector<8x128xf32>,
    return
  }
  func.func @transform_0(%arg0: i32) -> (i32, i32, i32) {
    %c0_i32 = arith.constant 0 : i32
    %c0_i32_0 = arith.constant 0 : i32
    %c0_i32_1 = arith.constant 0 : i32
    return %arg0, %c0_i32, %c0_i32_0 : i32, i32, i32
  }
  func.func @transform_1(%arg0: i32) -> (i32, i32) {
    %c0_i32 = arith.constant 0 : i32
    %c0_i32_0 = arith.constant 0 : i32
    %c0_i32_1 = arith.constant 0 : i32
    return %c0_i32, %c0_i32_0 : i32, i32
  }
  func.func @transform_2(%arg0: i32) -> (i32, i32) {
    %c0_i32 = arith.constant 0 : i32
    %c0_i32_0 = arith.constant 0 : i32
    %c0_i32_1 = arith.constant 0 : i32
    return %c0_i32, %c0_i32_0 : i32, i32
  }
  func.func @transform_3(%arg0: i32) -> (i32, i32) {
    %c0_i32 = arith.constant 0 : i32
    %c0_i32_0 = arith.constant 0 : i32
    %c0_i32_1 = arith.constant 0 : i32
    return %c0_i32, %c0_i32_0 : i32, i32
  }
  func.func @transform_4(%arg0: i32) -> (i32, i32) {
    %c0_i32 = arith.constant 0 : i32
    %c0_i32_0 = arith.constant 0 : i32
    %c0_i32_1 = arith.constant 0 : i32
    return %c0_i32, %c0_i32_0 : i32, i32
  }
  func.func @transform_5(%arg0: i32) -> (i32, i32) {
    %c0_i32 = arith.constant 0 : i32
    %c0_i32_0 = arith.constant 0 : i32
    %c0_i32_1 = arith.constant 0 : i32
    return %c0_i32, %c0_i32_0 : i32, i32
  }
  func.func @transform_6(%arg0: i32) -> (i32, i32) {
    %c0_i32 = arith.constant 0 : i32
    %c0_i32_0 = arith.constant 0 : i32
    %c0_i32_1 = arith.constant 0 : i32
    return %c0_i32, %c0_i32_0 : i32, i32
  }
  func.func @transform_7(%arg0: i32) -> (i32, i32) {
    %c0_i32 = arith.constant 0 : i32
    %c0_i32_0 = arith.constant 0 : i32
    return %arg0, %c0_i32 : i32, i32
  }
}

</mosaic_0001>

<llo_original>
// kernel: tpu_custom_call.1
$region0: #{tpu_custom_call.1}
  #allocation0 [shape = 'u32[]', space=smem, size = 0x4, offset = 0x4, fixed_abs, tag = 'smem constant byte address 0x4 - core index']
  #allocation1 [shape = 'u32[144,128]{1,0:T(1,128)}', space=vmem, size = 0x12000, scoped, tag = 'internal scratch']
  %s0 = inlined_call_operand.hbm [shape: f32[8,16,128], index: 0, kind: input, shape index: {}]
  %s1 = inlined_call_operand.hbm [shape: f32[128,256], index: 1, kind: input, shape index: {}]
  %s2 = inlined_call_operand.vmem [shape: f32[1,256], index: 2, kind: input, shape index: {}]
  %s3 = inlined_call_operand.hbm [shape: f32[640,256], index: 3, kind: input, shape index: {}]
  %s4 = inlined_call_operand.vmem [shape: f32[1,256], index: 4, kind: input, shape index: {}]
  %s5 = inlined_call_operand.hbm [shape: f32[512,128], index: 5, kind: input, shape index: {}]
  %s6 = inlined_call_operand.vmem [shape: f32[1,128], index: 6, kind: input, shape index: {}]
  %s7 = inlined_call_operand.hbm [shape: f32[8,128], index: 7, kind: output, shape index: {}]
  %s8 = sld [smem:[#allocation0]]
  $region54: #{tpu_custom_call.1} parent=0
    _
  %s10 = ssub.s32 1, %s8
  %s11 = scalar_select 0, %s10, %s8
  $region1: #{tpu_custom_call.1} parent=0
    #allocation2 [shape = 'u8[65536]{0}', space=vmem, size = 0x10000, scoped, tag = 'input window, operand 0, single buffered']
    #allocation3 [shape = 's32[1]{0}', space=sflag, size = 0x4, scoped, tag = 'scoped memory for tpu_custom_call.1']
    #allocation4 [shape = 's32[1]{0}', space=sflag, size = 0x4, scoped, tag = 'scoped memory for tpu_custom_call.1']
    #allocation5 [shape = 'u8[131072]{0}', space=vmem, size = 0x20000, scoped, tag = 'input window, operand 1, single buffered']
    #allocation6 [shape = 's32[1]{0}', space=sflag, size = 0x4, scoped, tag = 'scoped memory for tpu_custom_call.1']
    #allocation7 [shape = 'u8[655360]{0}', space=vmem, size = 0xa0000, scoped, tag = 'input window, operand 3, single buffered']
    #allocation8 [shape = 'u8[262144]{0}', space=vmem, size = 0x40000, scoped, tag = 'input window, operand 5, single buffered']
    #allocation9 [shape = 's32[1]{0}', space=sflag, size = 0x4, scoped, tag = 'scoped memory for tpu_custom_call.1']
    #allocation10 [shape = 'u8[4096]{0}', space=vmem, size = 0x1000, scoped, tag = 'output window, operand 0, single buffered']
    %12 = vsyncpa [#allocation3], 0
    %13 = vsyncpa [#allocation6], 0
    %14 = vsyncpa [#allocation9], 0
    %15 = vsyncpa [#allocation4], 0
    // Predicated region
    $region2: #{tpu_custom_call.1} parent=1 // pred_check
      _
    $region3: #{tpu_custom_call.1} parent=1 // pred_check_branch
      %17 = sbr.rel (0) target = $region5
    $region4: #{tpu_custom_call.1} parent=1 // pred_region
      %s19 = ssub.s32 2048, 2048
      %20 = vsyncadd [#allocation3], %s19
      %s21 = sshll.u32 [#allocation2], 4
      %s22 = int_to_ptr.vmem [resolvable:$true] %s21
      %27 = dma.hbm_to_vmem [thread:$0]  %s0, 2048, %s22, [#allocation3], 128, 128, 8
    $region5: #{tpu_custom_call.1} parent=1 // pred_fallthru
      _
    // Predicated region
    $region6: #{tpu_custom_call.1} parent=1 // pred_check
      _
    $region7: #{tpu_custom_call.1} parent=1 // pred_check_branch
      %29 = sbr.rel (0) target = $region9
    $region8: #{tpu_custom_call.1} parent=1 // pred_region
      %s31 = ssub.s32 4096, 4096
      %32 = vsyncadd [#allocation6], %s31
      %s33 = sshll.u32 [#allocation5], 4
      %s34 = int_to_ptr.vmem [resolvable:$true] %s33
      %39 = dma.hbm_to_vmem [thread:$0]  %s1, 4096, %s34, [#allocation6], 256, 256, 16
    $region9: #{tpu_custom_call.1} parent=1 // pred_fallthru
      _
    // Predicated region
    $region10: #{tpu_custom_call.1} parent=1 // pred_check
      _
    $region11: #{tpu_custom_call.1} parent=1 // pred_check_branch
      %41 = sbr.rel (0) target = $region13
    $region12: #{tpu_custom_call.1} parent=1 // pred_region
      _
    $region13: #{tpu_custom_call.1} parent=1 // pred_fallthru
      _
    // Predicated region
    $region14: #{tpu_custom_call.1} parent=1 // pred_check
      _
    $region15: #{tpu_custom_call.1} parent=1 // pred_check_branch
      %43 = sbr.rel (0) target = $region17
    $region16: #{tpu_custom_call.1} parent=1 // pred_region
      %s45 = ssub.s32 20480, 20480
      %46 = vsyncadd [#allocation6], %s45
      %s47 = sshll.u32 [#allocation7], 4
      %s48 = int_to_ptr.vmem [resolvable:$true] %s47
      %53 = dma.hbm_to_vmem [thread:$0]  %s3, 20480, %s48, [#allocation6], 256, 256, 16
    $region17: #{tpu_custom_call.1} parent=1 // pred_fallthru
      _
    // Predicated region
    $region18: #{tpu_custom_call.1} parent=1 // pred_check
      _
    $region19: #{tpu_custom_call.1} parent=1 // pred_check_branch
      %55 = sbr.rel (0) target = $region21
    $region20: #{tpu_custom_call.1} parent=1 // pred_region
      _
    $region21: #{tpu_custom_call.1} parent=1 // pred_fallthru
      _
    // Predicated region
    $region22: #{tpu_custom_call.1} parent=1 // pred_check
      _
    $region23: #{tpu_custom_call.1} parent=1 // pred_check_branch
      %57 = sbr.rel (0) target = $region25
    $region24: #{tpu_custom_call.1} parent=1 // pred_region
      %s59 = ssub.s32 8192, 8192
      %60 = vsyncadd [#allocation9], %s59
      %s61 = sshll.u32 [#allocation8], 4
      %s62 = int_to_ptr.vmem [resolvable:$true] %s61
      %67 = dma.hbm_to_vmem [thread:$0]  %s5, 8192, %s62, [#allocation9], 128, 128, 8
    $region25: #{tpu_custom_call.1} parent=1 // pred_fallthru
      _
    // Predicated region
    $region26: #{tpu_custom_call.1} parent=1 // pred_check
      _
    $region27: #{tpu_custom_call.1} parent=1 // pred_check_branch
      %69 = sbr.rel (0) target = $region29
    $region28: #{tpu_custom_call.1} parent=1 // pred_region
      _
    $region29: #{tpu_custom_call.1} parent=1 // pred_fallthru
      _
    // Predicated region
    $region30: #{tpu_custom_call.1} parent=1 // pred_check
      _
    $region31: #{tpu_custom_call.1} parent=1 // pred_check_branch
      %71 = sbr.rel (0) target = $region33
    $region32: #{tpu_custom_call.1} parent=1 // pred_region
      %72 = dma.done [#allocation3], 2048
    $region33: #{tpu_custom_call.1} parent=1 // pred_fallthru
      _
    // Predicated region
    $region34: #{tpu_custom_call.1} parent=1 // pred_check
      _
    $region35: #{tpu_custom_call.1} parent=1 // pred_check_branch
      %74 = sbr.rel (0) target = $region37
    $region36: #{tpu_custom_call.1} parent=1 // pred_region
      %75 = dma.done [#allocation6], 4096
    $region37: #{tpu_custom_call.1} parent=1 // pred_fallthru
      _
    // Predicated region
    $region38: #{tpu_custom_call.1} parent=1 // pred_check
      _
    $region39: #{tpu_custom_call.1} parent=1 // pred_check_branch
      %77 = sbr.rel (0) target = $region41
    $region40: #{tpu_custom_call.1} parent=1 // pred_region
      %78 = dma.done [#allocation6], 20480
    $region41: #{tpu_custom_call.1} parent=1 // pred_fallthru
      _
    // Predicated region
    $region42: #{tpu_custom_call.1} parent=1 // pred_check
      _
    $region43: #{tpu_custom_call.1} parent=1 // pred_check_branch
      %80 = sbr.rel (0) target = $region45
    $region44: #{tpu_custom_call.1} parent=1 // pred_region
      %81 = dma.done [#allocation9], 8192
    $region45: #{tpu_custom_call.1} parent=1 // pred_fallthru
      _
    %v82 = vld [vmem:[#allocation2] sm:$0xff]
    %v83 = vld [vmem:[#allocation2 + $0x8] sm:$0xff]
    %v84 = vld [vmem:[#allocation2 + $0x10] sm:$0xff]
    %v85 = vld [vmem:[#allocation2 + $0x18] sm:$0xff]
    %v86 = vld [vmem:[#allocation2 + $0x20] sm:$0xff]
    %v87 = vld [vmem:[#allocation2 + $0x28] sm:$0xff]
    %v88 = vld [vmem:[#allocation2 + $0x30] sm:$0xff]
    %v89 = vld [vmem:[#allocation2 + $0x38] sm:$0xff]
    %v90 = vld [vmem:[#allocation2 + $0x40] sm:$0xff]
    %v91 = vld [vmem:[#allocation2 + $0x48] sm:$0xff]
    %v92 = vld [vmem:[#allocation2 + $0x50] sm:$0xff]
    %v93 = vld [vmem:[#allocation2 + $0x58] sm:$0xff]
    %v94 = vld [vmem:[#allocation2 + $0x60] sm:$0xff]
    %v95 = vld [vmem:[#allocation2 + $0x68] sm:$0xff]
    %v96 = vld [vmem:[#allocation2 + $0x70] sm:$0xff]
    %v97 = vld [vmem:[#allocation2 + $0x78] sm:$0xff]
    %v98 = vld [vmem:[#allocation5] sm:$0xff]
    %v99 = vld [vmem:[#allocation5 + $0x8] sm:$0xff]
    %v100 = vld [vmem:[#allocation5 + $0x10] sm:$0xff]
    %v101 = vld [vmem:[#allocation5 + $0x18] sm:$0xff]
    %v102 = vld [vmem:[#allocation5 + $0x20] sm:$0xff]
    %v103 = vld [vmem:[#allocation5 + $0x28] sm:$0xff]
    %v104 = vld [vmem:[#allocation5 + $0x30] sm:$0xff]
    %v105 = vld [vmem:[#allocation5 + $0x38] sm:$0xff]
    %v106 = vld [vmem:[#allocation5 + $0x40] sm:$0xff]
    %v107 = vld [vmem:[#allocation5 + $0x48] sm:$0xff]
    %v108 = vld [vmem:[#allocation5 + $0x50] sm:$0xff]
    %v109 = vld [vmem:[#allocation5 + $0x58] sm:$0xff]
    %v110 = vld [vmem:[#allocation5 + $0x60] sm:$0xff]
    %v111 = vld [vmem:[#allocation5 + $0x68] sm:$0xff]
    %v112 = vld [vmem:[#allocation5 + $0x70] sm:$0xff]
    %v113 = vld [vmem:[#allocation5 + $0x78] sm:$0xff]
    %v114 = vld [vmem:[#allocation5 + $0x80] sm:$0xff]
    %v115 = vld [vmem:[#allocation5 + $0x88] sm:$0xff]
    %v116 = vld [vmem:[#allocation5 + $0x90] sm:$0xff]
    %v117 = vld [vmem:[#allocation5 + $0x98] sm:$0xff]
    %v118 = vld [vmem:[#allocation5 + $0xa0] sm:$0xff]
    %v119 = vld [vmem:[#allocation5 + $0xa8] sm:$0xff]
    %v120 = vld [vmem:[#allocation5 + $0xb0] sm:$0xff]
    %v121 = vld [vmem:[#allocation5 + $0xb8] sm:$0xff]
    %v122 = vld [vmem:[#allocation5 + $0xc0] sm:$0xff]
    %v123 = vld [vmem:[#allocation5 + $0xc8] sm:$0xff]
    %v124 = vld [vmem:[#allocation5 + $0xd0] sm:$0xff]
    %v125 = vld [vmem:[#allocation5 + $0xd8] sm:$0xff]
    %v126 = vld [vmem:[#allocation5 + $0xe0] sm:$0xff]
    %v127 = vld [vmem:[#allocation5 + $0xe8] sm:$0xff]
    %v128 = vld [vmem:[#allocation5 + $0xf0] sm:$0xff]
    %v129 = vld [vmem:[#allocation5 + $0xf8] sm:$0xff]
    %v130 = vld [vmem:[%s2] sm:$0x3]
    %v132 = vlaneseq
    %v133 = vshrl.u32 %v132, 7
    %v134 = vsub.s32 0, %v133
    %v135 = vrot.slane %v130, %v134
    %v136 = vlaneseq
    %v137 = vshrl.u32 %v136, 7
    %v138 = vsub.s32 1, %v137
    %v139 = vrot.slane %v130, %v138
    %142 = vmatprep.subr.mxu0 %v99
    %143 = vmatpush1.msra.mxu0 %v98
    %144 = vmatprep.subr.mxu0 %v101
    %145 = vmatpush1.msra.mxu0 %v100
    %146 = vmatprep.subr.mxu0 %v103
    %147 = vmatpush1.msra.mxu0 %v102
    %148 = vmatprep.subr.mxu0 %v105
    %149 = vmatpush1.msra.mxu0 %v104
    %150 = vmatprep.subr.mxu0 %v107
    %151 = vmatpush1.msra.mxu0 %v106
    %152 = vmatprep.subr.mxu0 %v109
    %153 = vmatpush1.msra.mxu0 %v108
    %154 = vmatprep.subr.mxu0 %v111
    %155 = vmatpush1.msra.mxu0 %v110
    %156 = vmatprep.subr.mxu0 %v113
    %157 = vmatpush1.msra.mxu0 %v112
    %158 = vmatprep.subr.mxu0 %v115
    %159 = vmatpush1.msra.mxu0 %v114
    %160 = vmatprep.subr.mxu0 %v117
    %161 = vmatpush1.msra.mxu0 %v116
    %162 = vmatprep.subr.mxu0 %v119
    %163 = vmatpush1.msra.mxu0 %v118
    %164 = vmatprep.subr.mxu0 %v121
    %165 = vmatpush1.msra.mxu0 %v120
    %166 = vmatprep.subr.mxu0 %v123
    %167 = vmatpush1.msra.mxu0 %v122
    %168 = vmatprep.subr.mxu0 %v125
    %169 = vmatpush1.msra.mxu0 %v124
    %170 = vmatprep.subr.mxu0 %v127
    %171 = vmatpush1.msra.mxu0 %v126
    %172 = vmatprep.subr.mxu0 %v129
    %173 = vmatpush1.msra.mxu0 %v128
    %174 = vmatprep.subr.mxu0 0.0
    %175 = vmatpush1.msra.mxu0 0.0
    %176 = vmatprep.subr.mxu0 0.0
    %177 = vmatpush1.msra.mxu0 0.0
    %178 = vmatprep.subr.mxu0 0.0
    %179 = vmatpush1.msra.mxu0 0.0
    %180 = vmatprep.subr.mxu0 0.0
    %181 = vmatpush1.msra.mxu0 0.0
    %182 = vmatprep.subr.mxu0 0.0
    %183 = vmatpush1.msra.mxu0 0.0
    %184 = vmatprep.subr.mxu0 0.0
    %185 = vmatpush1.msra.mxu0 0.0
    %186 = vmatprep.subr.mxu0 0.0
    %187 = vmatpush1.msra.mxu0 0.0
    %188 = vmatprep.subr.mxu0 0.0
    %189 = vmatpush1.msra.mxu0 0.0
    %190 = vmatprep.subr.mxu0 0.0
    %191 = vmatpush1.msra.mxu0 0.0
    %192 = vmatprep.subr.mxu0 0.0
    %193 = vmatpush1.msra.mxu0 0.0
    %194 = vmatprep.subr.mxu0 0.0
    %195 = vmatpush1.msra.mxu0 0.0
    %196 = vmatprep.subr.mxu0 0.0
    %197 = vmatpush1.msra.mxu0 0.0
    %198 = vmatprep.subr.mxu0 0.0
    %199 = vmatpush1.msra.mxu0 0.0
    %200 = vmatprep.subr.mxu0 0.0
    %201 = vmatpush1.msra.mxu0 0.0
    %202 = vmatprep.subr.mxu0 0.0
    %203 = vmatpush1.msra.mxu0 0.0
    %204 = vmatprep.subr.mxu0 0.0
    %205 = vmatpush1.msra.mxu0 0.0
    %206 = vmatprep.mubr.f32.mxu0 0.0
    %207 = vmatmul.mubr.f32.gmra.mrb[0].mxu0 %v82
    %v208 = vpop.f32.mrb[0].mxu0
    %v209 = vadd.f32 %v135, %v208
    %v210 = vpop.f32.mrb[0].mxu0
    %v211 = vadd.f32 %v139, %v210
    %212 = vmatprep.mubr.f32.mxu0 0.0
    %213 = vmatmul.mubr.f32.gmra.mrb[0].mxu0 %v83
    %v214 = vpop.f32.mrb[0].mxu0
    %v215 = vadd.f32 %v135, %v214
    %v216 = vpop.f32.mrb[0].mxu0
    %v217 = vadd.f32 %v139, %v216
    %218 = vmatprep.mubr.f32.mxu0 0.0
    %219 = vmatmul.mubr.f32.gmra.mrb[0].mxu0 %v84
    %v220 = vpop.f32.mrb[0].mxu0
    %v221 = vadd.f32 %v135, %v220
    %v222 = vpop.f32.mrb[0].mxu0
    %v223 = vadd.f32 %v139, %v222
    %224 = vmatprep.mubr.f32.mxu0 0.0
    %225 = vmatmul.mubr.f32.gmra.mrb[0].mxu0 %v85
    %v226 = vpop.f32.mrb[0].mxu0
    %v227 = vadd.f32 %v135, %v226
    %v228 = vpop.f32.mrb[0].mxu0
    %v229 = vadd.f32 %v139, %v228
    %230 = vmatprep.mubr.f32.mxu0 0.0
    %231 = vmatmul.mubr.f32.gmra.mrb[0].mxu0 %v86
    %v232 = vpop.f32.mrb[0].mxu0
    %v233 = vadd.f32 %v135, %v232
    %v234 = vpop.f32.mrb[0].mxu0
    %v235 = vadd.f32 %v139, %v234
    %236 = vmatprep.mubr.f32.mxu0 0.0
    %237 = vmatmul.mubr.f32.gmra.mrb[0].mxu0 %v87
    %v238 = vpop.f32.mrb[0].mxu0
    %v239 = vadd.f32 %v135, %v238
    %v240 = vpop.f32.mrb[0].mxu0
    %v241 = vadd.f32 %v139, %v240
    %242 = vmatprep.mubr.f32.mxu0 0.0
    %243 = vmatmul.mubr.f32.gmra.mrb[0].mxu0 %v88
    %v244 = vpop.f32.mrb[0].mxu0
    %v245 = vadd.f32 %v135, %v244
    %v246 = vpop.f32.mrb[0].mxu0
    %v247 = vadd.f32 %v139, %v246
    %248 = vmatprep.mubr.f32.mxu0 0.0
    %249 = vmatmul.mubr.f32.gmra.mrb[0].mxu0 %v89
    %v250 = vpop.f32.mrb[0].mxu0
    %v251 = vadd.f32 %v135, %v250
    %v252 = vpop.f32.mrb[0].mxu0
    %v253 = vadd.f32 %v139, %v252
    %254 = vmatprep.mubr.f32.mxu0 0.0
    %255 = vmatmul.mubr.f32.gmra.mrb[0].mxu0 %v90
    %v256 = vpop.f32.mrb[0].mxu0
    %v257 = vadd.f32 %v135, %v256
    %v258 = vpop.f32.mrb[0].mxu0
    %v259 = vadd.f32 %v139, %v258
    %260 = vmatprep.mubr.f32.mxu0 0.0
    %261 = vmatmul.mubr.f32.gmra.mrb[0].mxu0 %v91
    %v262 = vpop.f32.mrb[0].mxu0
    %v263 = vadd.f32 %v135, %v262
    %v264 = vpop.f32.mrb[0].mxu0
    %v265 = vadd.f32 %v139, %v264
    %266 = vmatprep.mubr.f32.mxu0 0.0
    %267 = vmatmul.mubr.f32.gmra.mrb[0].mxu0 %v92
    %v268 = vpop.f32.mrb[0].mxu0
    %v269 = vadd.f32 %v135, %v268
    %v270 = vpop.f32.mrb[0].mxu0
    %v271 = vadd.f32 %v139, %v270
    %272 = vmatprep.mubr.f32.mxu0 0.0
    %273 = vmatmul.mubr.f32.gmra.mrb[0].mxu0 %v93
    %v274 = vpop.f32.mrb[0].mxu0
    %v275 = vadd.f32 %v135, %v274
    %v276 = vpop.f32.mrb[0].mxu0
    %v277 = vadd.f32 %v139, %v276
    %278 = vmatprep.mubr.f32.mxu0 0.0
    %279 = vmatmul.mubr.f32.gmra.mrb[0].mxu0 %v94
    %v280 = vpop.f32.mrb[0].mxu0
    %v281 = vadd.f32 %v135, %v280
    %v282 = vpop.f32.mrb[0].mxu0
    %v283 = vadd.f32 %v139, %v282
    %284 = vmatprep.mubr.f32.mxu0 0.0
    %285 = vmatmul.mubr.f32.gmra.mrb[0].mxu0 %v95
    %v286 = vpop.f32.mrb[0].mxu0
    %v287 = vadd.f32 %v135, %v286
    %v288 = vpop.f32.mrb[0].mxu0
    %v289 = vadd.f32 %v139, %v288
    %290 = vmatprep.mubr.f32.mxu0 0.0
    %291 = vmatmul.mubr.f32.gmra.mrb[0].mxu0 %v96
    %v292 = vpop.f32.mrb[0].mxu0
    %v293 = vadd.f32 %v135, %v292
    %v294 = vpop.f32.mrb[0].mxu0
    %v295 = vadd.f32 %v139, %v294
    %296 = vmatprep.mubr.f32.mxu0 0.0
    %297 = vmatmul.mubr.f32.gmra.mrb[0].mxu0 %v97
    %v298 = vpop.f32.mrb[0].mxu0
    %v299 = vadd.f32 %v135, %v298
    %v300 = vpop.f32.mrb[0].mxu0
    %v301 = vadd.f32 %v139, %v300
    %302 = vdwg.mxu0
    %v303 = vmax.f32 %v209, 0.0
    %v304 = vmax.f32 %v211, 0.0
    %v305 = vmax.f32 %v215, 0.0
    %v306 = vmax.f32 %v217, 0.0
    %v307 = vmax.f32 %v221, 0.0
    %v308 = vmax.f32 %v223, 0.0
    %v309 = vmax.f32 %v227, 0.0
    %v310 = vmax.f32 %v229, 0.0
    %v311 = vmax.f32 %v233, 0.0
    %v312 = vmax.f32 %v235, 0.0
    %v313 = vmax.f32 %v239, 0.0
    %v314 = vmax.f32 %v241, 0.0
    %v315 = vmax.f32 %v245, 0.0
    %v316 = vmax.f32 %v247, 0.0
    %v317 = vmax.f32 %v251, 0.0
    %v318 = vmax.f32 %v253, 0.0
    %v319 = vmax.f32 %v257, 0.0
    %v320 = vmax.f32 %v259, 0.0
    %v321 = vmax.f32 %v263, 0.0
    %v322 = vmax.f32 %v265, 0.0
    %v323 = vmax.f32 %v269, 0.0
    %v324 = vmax.f32 %v271, 0.0
    %v325 = vmax.f32 %v275, 0.0
    %v326 = vmax.f32 %v277, 0.0
    %v327 = vmax.f32 %v281, 0.0
    %v328 = vmax.f32 %v283, 0.0
    %v329 = vmax.f32 %v287, 0.0
    %v330 = vmax.f32 %v289, 0.0
    %v331 = vmax.f32 %v293, 0.0
    %v332 = vmax.f32 %v295, 0.0
    %v333 = vmax.f32 %v299, 0.0
    %v334 = vmax.f32 %v301, 0.0
    %v335 = vmax.f32 %v303, %v305
    %v336 = vmax.f32 %v304, %v306
    %v337 = vmax.f32 %v307, %v309
    %v338 = vmax.f32 %v308, %v310
    %v339 = vmax.f32 %v311, %v313
    %v340 = vmax.f32 %v312, %v314
    %v341 = vmax.f32 %v315, %v317
    %v342 = vmax.f32 %v316, %v318
    %v343 = vmax.f32 %v319, %v321
    %v344 = vmax.f32 %v320, %v322
    %v345 = vmax.f32 %v323, %v325
    %v346 = vmax.f32 %v324, %v326
    %v347 = vmax.f32 %v327, %v329
    %v348 = vmax.f32 %v328, %v330
    %v349 = vmax.f32 %v331, %v333
    %v350 = vmax.f32 %v332, %v334
    %v351 = vmax.f32 %v335, %v336
    %v352 = vmax.f32 %v337, %v338
    %v353 = vmax.f32 %v339, %v340
    %v354 = vmax.f32 %v341, %v342
    %v355 = vmax.f32 %v343, %v344
    %v356 = vmax.f32 %v345, %v346
    %v357 = vmax.f32 %v347, %v348
    %v358 = vmax.f32 %v349, %v350
    %v367 = vrot.slane %v351, 6
    %v368 = vrot.slane %v352, 6
    %v369 = vrot.slane %v353, 6
    %v370 = vrot.slane %v354, 6
    %v371 = vrot.slane %v355, 6
    %v372 = vrot.slane %v356, 6
    %v373 = vrot.slane %v357, 6
    %v374 = vrot.slane %v358, 6
    %vm383 = vcmask 1041408
    %v384 = vsel %vm383, 0.0, %v367
    %v385 = vsel %vm383, 0.0, %v368
    %v386 = vsel %vm383, 0.0, %v369
    %v387 = vsel %vm383, 0.0, %v370
    %v388 = vsel %vm383, 0.0, %v371
    %v389 = vsel %vm383, 0.0, %v372
    %v390 = vsel %vm383, 0.0, %v373
    %v391 = vsel %vm383, 0.0, %v374
    %v392 = vsel %vm383, %v367, 0.0
    %v393 = vsel %vm383, %v368, 0.0
    %v394 = vsel %vm383, %v369, 0.0
    %v395 = vsel %vm383, %v370, 0.0
    %v396 = vsel %vm383, %v371, 0.0
    %v397 = vsel %vm383, %v372, 0.0
    %v398 = vsel %vm383, %v373, 0.0
    %v399 = vsel %vm383, %v374, 0.0
    %vm416 = vcmask 1046528
    %v417 = vrot.slane %v384, 1
    %v418 = vrot.slane %v392, 1
    %v419 = vsel %vm416, %v417, %v418
    %v420 = vrot.slane %v385, 1
    %v421 = vrot.slane %v393, 1
    %v422 = vsel %vm416, %v420, %v421
    %v423 = vrot.slane %v386, 1
    %v424 = vrot.slane %v394, 1
    %v425 = vsel %vm416, %v423, %v424
    %v426 = vrot.slane %v387, 1
    %v427 = vrot.slane %v395, 1
    %v428 = vsel %vm416, %v426, %v427
    %v429 = vrot.slane %v388, 1
    %v430 = vrot.slane %v396, 1
    %v431 = vsel %vm416, %v429, %v430
    %v432 = vrot.slane %v389, 1
    %v433 = vrot.slane %v397, 1
    %v434 = vsel %vm416, %v432, %v433
    %v435 = vrot.slane %v390, 1
    %v436 = vrot.slane %v398, 1
    %v437 = vsel %vm416, %v435, %v436
    %v438 = vrot.slane %v391, 1
    %v439 = vrot.slane %v399, 1
    %v440 = vsel %vm416, %v438, %v439
    %vm449 = vcmask 1045504
    %v450 = vrot.slane %v384, 2
    %v451 = vrot.slane %v392, 2
    %v452 = vsel %vm449, %v450, %v451
    %v453 = vrot.slane %v385, 2
    %v454 = vrot.slane %v393, 2
    %v455 = vsel %vm449, %v453, %v454
    %v456 = vrot.slane %v386, 2
    %v457 = vrot.slane %v394, 2
    %v458 = vsel %vm449, %v456, %v457
    %v459 = vrot.slane %v387, 2
    %v460 = vrot.slane %v395, 2
    %v461 = vsel %vm449, %v459, %v460
    %v462 = vrot.slane %v388, 2
    %v463 = vrot.slane %v396, 2
    %v464 = vsel %vm449, %v462, %v463
    %v465 = vrot.slane %v389, 2
    %v466 = vrot.slane %v397, 2
    %v467 = vsel %vm449, %v465, %v466
    %v468 = vrot.slane %v390, 2
    %v469 = vrot.slane %v398, 2
    %v470 = vsel %vm449, %v468, %v469
    %v471 = vrot.slane %v391, 2
    %v472 = vrot.slane %v399, 2
    %v473 = vsel %vm449, %v471, %v472
    %vm482 = vcmask 1044480
    %v483 = vrot.slane %v384, 3
    %v484 = vrot.slane %v392, 3
    %v485 = vsel %vm482, %v483, %v484
    %v486 = vrot.slane %v385, 3
    %v487 = vrot.slane %v393, 3
    %v488 = vsel %vm482, %v486, %v487
    %v489 = vrot.slane %v386, 3
    %v490 = vrot.slane %v394, 3
    %v491 = vsel %vm482, %v489, %v490
    %v492 = vrot.slane %v387, 3
    %v493 = vrot.slane %v395, 3
    %v494 = vsel %vm482, %v492, %v493
    %v495 = vrot.slane %v388, 3
    %v496 = vrot.slane %v396, 3
    %v497 = vsel %vm482, %v495, %v496
    %v498 = vrot.slane %v389, 3
    %v499 = vrot.slane %v397, 3
    %v500 = vsel %vm482, %v498, %v499
    %v501 = vrot.slane %v390, 3
    %v502 = vrot.slane %v398, 3
    %v503 = vsel %vm482, %v501, %v502
    %v504 = vrot.slane %v391, 3
    %v505 = vrot.slane %v399, 3
    %v506 = vsel %vm482, %v504, %v505
    %vm515 = vcmask 1043456
    %v516 = vrot.slane %v384, 4
    %v517 = vrot.slane %v392, 4
    %v518 = vsel %vm515, %v516, %v517
    %v519 = vrot.slane %v385, 4
    %v520 = vrot.slane %v393, 4
    %v521 = vsel %vm515, %v519, %v520
    %v522 = vrot.slane %v386, 4
    %v523 = vrot.slane %v394, 4
    %v524 = vsel %vm515, %v522, %v523
    %v525 = vrot.slane %v387, 4
    %v526 = vrot.slane %v395, 4
    %v527 = vsel %vm515, %v525, %v526
    %v528 = vrot.slane %v388, 4
    %v529 = vrot.slane %v396, 4
    %v530 = vsel %vm515, %v528, %v529
    %v531 = vrot.slane %v389, 4
    %v532 = vrot.slane %v397, 4
    %v533 = vsel %vm515, %v531, %v532
    %v534 = vrot.slane %v390, 4
    %v535 = vrot.slane %v398, 4
    %v536 = vsel %vm515, %v534, %v535
    %v537 = vrot.slane %v391, 4
    %v538 = vrot.slane %v399, 4
    %v539 = vsel %vm515, %v537, %v538
    %v548 = vld [vmem:[#allocation7] sm:$0xff]
    %v549 = vld [vmem:[#allocation7 + $0x8] sm:$0xff]
    %v550 = vld [vmem:[#allocation7 + $0x10] sm:$0xff]
    %v551 = vld [vmem:[#allocation7 + $0x18] sm:$0xff]
    %v552 = vld [vmem:[#allocation7 + $0x20] sm:$0xff]
    %v553 = vld [vmem:[#allocation7 + $0x28] sm:$0xff]
    %v554 = vld [vmem:[#allocation7 + $0x30] sm:$0xff]
    %v555 = vld [vmem:[#allocation7 + $0x38] sm:$0xff]
    %v556 = vld [vmem:[#allocation7 + $0x40] sm:$0xff]
    %v557 = vld [vmem:[#allocation7 + $0x48] sm:$0xff]
    %v558 = vld [vmem:[#allocation7 + $0x50] sm:$0xff]
    %v559 = vld [vmem:[#allocation7 + $0x58] sm:$0xff]
    %v560 = vld [vmem:[#allocation7 + $0x60] sm:$0xff]
    %v561 = vld [vmem:[#allocation7 + $0x68] sm:$0xff]
    %v562 = vld [vmem:[#allocation7 + $0x70] sm:$0xff]
    %v563 = vld [vmem:[#allocation7 + $0x78] sm:$0xff]
    %v564 = vld [vmem:[#allocation7 + $0x80] sm:$0xff]
    %v565 = vld [vmem:[#allocation7 + $0x88] sm:$0xff]
    %v566 = vld [vmem:[#allocation7 + $0x90] sm:$0xff]
    %v567 = vld [vmem:[#allocation7 + $0x98] sm:$0xff]
    %v568 = vld [vmem:[#allocation7 + $0xa0] sm:$0xff]
    %v569 = vld [vmem:[#allocation7 + $0xa8] sm:$0xff]
    %v570 = vld [vmem:[#allocation7 + $0xb0] sm:$0xff]
    %v571 = vld [vmem:[#allocation7 + $0xb8] sm:$0xff]
    %v572 = vld [vmem:[#allocation7 + $0xc0] sm:$0xff]
    %v573 = vld [vmem:[#allocation7 + $0xc8] sm:$0xff]
    %v574 = vld [vmem:[#allocation7 + $0xd0] sm:$0xff]
    %v575 = vld [vmem:[#allocation7 + $0xd8] sm:$0xff]
    %v576 = vld [vmem:[#allocation7 + $0xe0] sm:$0xff]
    %v577 = vld [vmem:[#allocation7 + $0xe8] sm:$0xff]
    %v578 = vld [vmem:[#allocation7 + $0xf0] sm:$0xff]
    %v579 = vld [vmem:[#allocation7 + $0xf8] sm:$0xff]
    %v580 = vld [vmem:[#allocation7 + $0x100] sm:$0xff]
    %v581 = vld [vmem:[#allocation7 + $0x108] sm:$0xff]
    %v582 = vld [vmem:[#allocation7 + $0x110] sm:$0xff]
    %v583 = vld [vmem:[#allocation7 + $0x118] sm:$0xff]
    %v584 = vld [vmem:[#allocation7 + $0x120] sm:$0xff]
    %v585 = vld [vmem:[#allocation7 + $0x128] sm:$0xff]
    %v586 = vld [vmem:[#allocation7 + $0x130] sm:$0xff]
    %v587 = vld [vmem:[#allocation7 + $0x138] sm:$0xff]
    %v588 = vld [vmem:[#allocation7 + $0x140] sm:$0xff]
    %v589 = vld [vmem:[#allocation7 + $0x148] sm:$0xff]
    %v590 = vld [vmem:[#allocation7 + $0x150] sm:$0xff]
    %v591 = vld [vmem:[#allocation7 + $0x158] sm:$0xff]
    %v592 = vld [vmem:[#allocation7 + $0x160] sm:$0xff]
    %v593 = vld [vmem:[#allocation7 + $0x168] sm:$0xff]
    %v594 = vld [vmem:[#allocation7 + $0x170] sm:$0xff]
    %v595 = vld [vmem:[#allocation7 + $0x178] sm:$0xff]
    %v596 = vld [vmem:[#allocation7 + $0x180] sm:$0xff]
    %v597 = vld [vmem:[#allocation7 + $0x188] sm:$0xff]
    %v598 = vld [vmem:[#allocation7 + $0x190] sm:$0xff]
    %v599 = vld [vmem:[#allocation7 + $0x198] sm:$0xff]
    %v600 = vld [vmem:[#allocation7 + $0x1a0] sm:$0xff]
    %v601 = vld [vmem:[#allocation7 + $0x1a8] sm:$0xff]
    %v602 = vld [vmem:[#allocation7 + $0x1b0] sm:$0xff]
    %v603 = vld [vmem:[#allocation7 + $0x1b8] sm:$0xff]
    %v604 = vld [vmem:[#allocation7 + $0x1c0] sm:$0xff]
    %v605 = vld [vmem:[#allocation7 + $0x1c8] sm:$0xff]
    %v606 = vld [vmem:[#allocation7 + $0x1d0] sm:$0xff]
    %v607 = vld [vmem:[#allocation7 + $0x1d8] sm:$0xff]
    %v608 = vld [vmem:[#allocation7 + $0x1e0] sm:$0xff]
    %v609 = vld [vmem:[#allocation7 + $0x1e8] sm:$0xff]
    %v610 = vld [vmem:[#allocation7 + $0x1f0] sm:$0xff]
    %v611 = vld [vmem:[#allocation7 + $0x1f8] sm:$0xff]
    %v612 = vld [vmem:[#allocation7 + $0x200] sm:$0xff]
    %v613 = vld [vmem:[#allocation7 + $0x208] sm:$0xff]
    %v614 = vld [vmem:[#allocation7 + $0x210] sm:$0xff]
    %v615 = vld [vmem:[#allocation7 + $0x218] sm:$0xff]
    %v616 = vld [vmem:[#allocation7 + $0x220] sm:$0xff]
    %v617 = vld [vmem:[#allocation7 + $0x228] sm:$0xff]
    %v618 = vld [vmem:[#allocation7 + $0x230] sm:$0xff]
    %v619 = vld [vmem:[#allocation7 + $0x238] sm:$0xff]
    %v620 = vld [vmem:[#allocation7 + $0x240] sm:$0xff]
    %v621 = vld [vmem:[#allocation7 + $0x248] sm:$0xff]
    %v622 = vld [vmem:[#allocation7 + $0x250] sm:$0xff]
    %v623 = vld [vmem:[#allocation7 + $0x258] sm:$0xff]
    %v624 = vld [vmem:[#allocation7 + $0x260] sm:$0xff]
    %v625 = vld [vmem:[#allocation7 + $0x268] sm:$0xff]
    %v626 = vld [vmem:[#allocation7 + $0x270] sm:$0xff]
    %v627 = vld [vmem:[#allocation7 + $0x278] sm:$0xff]
    %v628 = vld [vmem:[#allocation7 + $0x280] sm:$0xff]
    %v629 = vld [vmem:[#allocation7 + $0x288] sm:$0xff]
    %v630 = vld [vmem:[#allocation7 + $0x290] sm:$0xff]
    %v631 = vld [vmem:[#allocation7 + $0x298] sm:$0xff]
    %v632 = vld [vmem:[#allocation7 + $0x2a0] sm:$0xff]
    %v633 = vld [vmem:[#allocation7 + $0x2a8] sm:$0xff]
    %v634 = vld [vmem:[#allocation7 + $0x2b0] sm:$0xff]
    %v635 = vld [vmem:[#allocation7 + $0x2b8] sm:$0xff]
    %v636 = vld [vmem:[#allocation7 + $0x2c0] sm:$0xff]
    %v637 = vld [vmem:[#allocation7 + $0x2c8] sm:$0xff]
    %v638 = vld [vmem:[#allocation7 + $0x2d0] sm:$0xff]
    %v639 = vld [vmem:[#allocation7 + $0x2d8] sm:$0xff]
    %v640 = vld [vmem:[#allocation7 + $0x2e0] sm:$0xff]
    %v641 = vld [vmem:[#allocation7 + $0x2e8] sm:$0xff]
    %v642 = vld [vmem:[#allocation7 + $0x2f0] sm:$0xff]
    %v643 = vld [vmem:[#allocation7 + $0x2f8] sm:$0xff]
    %v644 = vld [vmem:[#allocation7 + $0x300] sm:$0xff]
    %v645 = vld [vmem:[#allocation7 + $0x308] sm:$0xff]
    %v646 = vld [vmem:[#allocation7 + $0x310] sm:$0xff]
    %v647 = vld [vmem:[#allocation7 + $0x318] sm:$0xff]
    %v648 = vld [vmem:[#allocation7 + $0x320] sm:$0xff]
    %v649 = vld [vmem:[#allocation7 + $0x328] sm:$0xff]
    %v650 = vld [vmem:[#allocation7 + $0x330] sm:$0xff]
    %v651 = vld [vmem:[#allocation7 + $0x338] sm:$0xff]
    %v652 = vld [vmem:[#allocation7 + $0x340] sm:$0xff]
    %v653 = vld [vmem:[#allocation7 + $0x348] sm:$0xff]
    %v654 = vld [vmem:[#allocation7 + $0x350] sm:$0xff]
    %v655 = vld [vmem:[#allocation7 + $0x358] sm:$0xff]
    %v656 = vld [vmem:[#allocation7 + $0x360] sm:$0xff]
    %v657 = vld [vmem:[#allocation7 + $0x368] sm:$0xff]
    %v658 = vld [vmem:[#allocation7 + $0x370] sm:$0xff]
    %v659 = vld [vmem:[#allocation7 + $0x378] sm:$0xff]
    %v660 = vld [vmem:[#allocation7 + $0x380] sm:$0xff]
    %v661 = vld [vmem:[#allocation7 + $0x388] sm:$0xff]
    %v662 = vld [vmem:[#allocation7 + $0x390] sm:$0xff]
    %v663 = vld [vmem:[#allocation7 + $0x398] sm:$0xff]
    %v664 = vld [vmem:[#allocation7 + $0x3a0] sm:$0xff]
    %v665 = vld [vmem:[#allocation7 + $0x3a8] sm:$0xff]
    %v666 = vld [vmem:[#allocation7 + $0x3b0] sm:$0xff]
    %v667 = vld [vmem:[#allocation7 + $0x3b8] sm:$0xff]
    %v668 = vld [vmem:[#allocation7 + $0x3c0] sm:$0xff]
    %v669 = vld [vmem:[#allocation7 + $0x3c8] sm:$0xff]
    %v670 = vld [vmem:[#allocation7 + $0x3d0] sm:$0xff]
    %v671 = vld [vmem:[#allocation7 + $0x3d8] sm:$0xff]
    %v672 = vld [vmem:[#allocation7 + $0x3e0] sm:$0xff]
    %v673 = vld [vmem:[#allocation7 + $0x3e8] sm:$0xff]
    %v674 = vld [vmem:[#allocation7 + $0x3f0] sm:$0xff]
    %v675 = vld [vmem:[#allocation7 + $0x3f8] sm:$0xff]
    %v676 = vld [vmem:[#allocation7 + $0x400] sm:$0xff]
    %v677 = vld [vmem:[#allocation7 + $0x408] sm:$0xff]
    %v678 = vld [vmem:[#allocation7 + $0x410] sm:$0xff]
    %v679 = vld [vmem:[#allocation7 + $0x418] sm:$0xff]
    %v680 = vld [vmem:[#allocation7 + $0x420] sm:$0xff]
    %v681 = vld [vmem:[#allocation7 + $0x428] sm:$0xff]
    %v682 = vld [vmem:[#allocation7 + $0x430] sm:$0xff]
    %v683 = vld [vmem:[#allocation7 + $0x438] sm:$0xff]
    %v684 = vld [vmem:[#allocation7 + $0x440] sm:$0xff]
    %v685 = vld [vmem:[#allocation7 + $0x448] sm:$0xff]
    %v686 = vld [vmem:[#allocation7 + $0x450] sm:$0xff]
    %v687 = vld [vmem:[#allocation7 + $0x458] sm:$0xff]
    %v688 = vld [vmem:[#allocation7 + $0x460] sm:$0xff]
    %v689 = vld [vmem:[#allocation7 + $0x468] sm:$0xff]
    %v690 = vld [vmem:[#allocation7 + $0x470] sm:$0xff]
    %v691 = vld [vmem:[#allocation7 + $0x478] sm:$0xff]
    %v692 = vld [vmem:[#allocation7 + $0x480] sm:$0xff]
    %v693 = vld [vmem:[#allocation7 + $0x488] sm:$0xff]
    %v694 = vld [vmem:[#allocation7 + $0x490] sm:$0xff]
    %v695 = vld [vmem:[#allocation7 + $0x498] sm:$0xff]
    %v696 = vld [vmem:[#allocation7 + $0x4a0] sm:$0xff]
    %v697 = vld [vmem:[#allocation7 + $0x4a8] sm:$0xff]
    %v698 = vld [vmem:[#allocation7 + $0x4b0] sm:$0xff]
    %v699 = vld [vmem:[#allocation7 + $0x4b8] sm:$0xff]
    %v700 = vld [vmem:[#allocation7 + $0x4c0] sm:$0xff]
    %v701 = vld [vmem:[#allocation7 + $0x4c8] sm:$0xff]
    %v702 = vld [vmem:[#allocation7 + $0x4d0] sm:$0xff]
    %v703 = vld [vmem:[#allocation7 + $0x4d8] sm:$0xff]
    %v704 = vld [vmem:[#allocation7 + $0x4e0] sm:$0xff]
    %v705 = vld [vmem:[#allocation7 + $0x4e8] sm:$0xff]
    %v706 = vld [vmem:[#allocation7 + $0x4f0] sm:$0xff]
    %v707 = vld [vmem:[#allocation7 + $0x4f8] sm:$0xff]
    %v708 = vld [vmem:[%s4] sm:$0x3]
    %v710 = vlaneseq
    %v711 = vshrl.u32 %v710, 7
    %v712 = vsub.s32 0, %v711
    %v713 = vrot.slane %v708, %v712
    %v714 = vlaneseq
    %v715 = vshrl.u32 %v714, 7
    %v716 = vsub.s32 1, %v715
    %v717 = vrot.slane %v708, %v716
    %720 = vmatprep.subr.mxu0 %v549
    %721 = vmatpush1.msra.mxu0 %v548
    %722 = vmatprep.subr.mxu0 %v551
    %723 = vmatpush1.msra.mxu0 %v550
    %724 = vmatprep.subr.mxu0 %v553
    %725 = vmatpush1.msra.mxu0 %v552
    %726 = vmatprep.subr.mxu0 %v555
    %727 = vmatpush1.msra.mxu0 %v554
    %728 = vmatprep.subr.mxu0 %v557
    %729 = vmatpush1.msra.mxu0 %v556
    %730 = vmatprep.subr.mxu0 %v559
    %731 = vmatpush1.msra.mxu0 %v558
    %732 = vmatprep.subr.mxu0 %v561
    %733 = vmatpush1.msra.mxu0 %v560
    %734 = vmatprep.subr.mxu0 %v563
    %735 = vmatpush1.msra.mxu0 %v562
    %736 = vmatprep.subr.mxu0 %v565
    %737 = vmatpush1.msra.mxu0 %v564
    %738 = vmatprep.subr.mxu0 %v567
    %739 = vmatpush1.msra.mxu0 %v566
    %740 = vmatprep.subr.mxu0 %v569
    %741 = vmatpush1.msra.mxu0 %v568
    %742 = vmatprep.subr.mxu0 %v571
    %743 = vmatpush1.msra.mxu0 %v570
    %744 = vmatprep.subr.mxu0 %v573
    %745 = vmatpush1.msra.mxu0 %v572
    %746 = vmatprep.subr.mxu0 %v575
    %747 = vmatpush1.msra.mxu0 %v574
    %748 = vmatprep.subr.mxu0 %v577
    %749 = vmatpush1.msra.mxu0 %v576
    %750 = vmatprep.subr.mxu0 %v579
    %751 = vmatpush1.msra.mxu0 %v578
    %752 = vmatprep.subr.mxu0 %v581
    %753 = vmatpush1.msra.mxu0 %v580
    %754 = vmatprep.subr.mxu0 %v583
    %755 = vmatpush1.msra.mxu0 %v582
    %756 = vmatprep.subr.mxu0 %v585
    %757 = vmatpush1.msra.mxu0 %v584
    %758 = vmatprep.subr.mxu0 %v587
    %759 = vmatpush1.msra.mxu0 %v586
    %760 = vmatprep.subr.mxu0 %v589
    %761 = vmatpush1.msra.mxu0 %v588
    %762 = vmatprep.subr.mxu0 %v591
    %763 = vmatpush1.msra.mxu0 %v590
    %764 = vmatprep.subr.mxu0 %v593
    %765 = vmatpush1.msra.mxu0 %v592
    %766 = vmatprep.subr.mxu0 %v595
    %767 = vmatpush1.msra.mxu0 %v594
    %768 = vmatprep.subr.mxu0 %v597
    %769 = vmatpush1.msra.mxu0 %v596
    %770 = vmatprep.subr.mxu0 %v599
    %771 = vmatpush1.msra.mxu0 %v598
    %772 = vmatprep.subr.mxu0 %v601
    %773 = vmatpush1.msra.mxu0 %v600
    %774 = vmatprep.subr.mxu0 %v603
    %775 = vmatpush1.msra.mxu0 %v602
    %776 = vmatprep.subr.mxu0 %v605
    %777 = vmatpush1.msra.mxu0 %v604
    %778 = vmatprep.subr.mxu0 %v607
    %779 = vmatpush1.msra.mxu0 %v606
    %780 = vmatprep.subr.mxu0 %v609
    %781 = vmatpush1.msra.mxu0 %v608
    %782 = vmatprep.subr.mxu0 %v611
    %783 = vmatpush1.msra.mxu0 %v610
    %784 = vmatprep.mubr.f32.mxu0 %v419
    %785 = vmatmul.mubr.f32.gmra.mrb[0].mxu0 %v384
    %v786 = vpop.f32.mrb[0].mxu0
    %v787 = vadd.f32 %v713, %v786
    %v788 = vpop.f32.mrb[0].mxu0
    %v789 = vadd.f32 %v717, %v788
    %790 = vmatprep.mubr.f32.mxu0 %v422
    %791 = vmatmul.mubr.f32.gmra.mrb[0].mxu0 %v385
    %v792 = vpop.f32.mrb[0].mxu0
    %v793 = vadd.f32 %v713, %v792
    %v794 = vpop.f32.mrb[0].mxu0
    %v795 = vadd.f32 %v717, %v794
    %796 = vmatprep.mubr.f32.mxu0 %v425
    %797 = vmatmul.mubr.f32.gmra.mrb[0].mxu0 %v386
    %v798 = vpop.f32.mrb[0].mxu0
    %v799 = vadd.f32 %v713, %v798
    %v800 = vpop.f32.mrb[0].mxu0
    %v801 = vadd.f32 %v717, %v800
    %802 = vmatprep.mubr.f32.mxu0 %v428
    %803 = vmatmul.mubr.f32.gmra.mrb[0].mxu0 %v387
    %v804 = vpop.f32.mrb[0].mxu0
    %v805 = vadd.f32 %v713, %v804
    %v806 = vpop.f32.mrb[0].mxu0
    %v807 = vadd.f32 %v717, %v806
    %808 = vmatprep.mubr.f32.mxu0 %v431
    %809 = vmatmul.mubr.f32.gmra.mrb[0].mxu0 %v388
    %v810 = vpop.f32.mrb[0].mxu0
    %v811 = vadd.f32 %v713, %v810
    %v812 = vpop.f32.mrb[0].mxu0
    %v813 = vadd.f32 %v717, %v812
    %814 = vmatprep.mubr.f32.mxu0 %v434
    %815 = vmatmul.mubr.f32.gmra.mrb[0].mxu0 %v389
    %v816 = vpop.f32.mrb[0].mxu0
    %v817 = vadd.f32 %v713, %v816
    %v818 = vpop.f32.mrb[0].mxu0
    %v819 = vadd.f32 %v717, %v818
    %820 = vmatprep.mubr.f32.mxu0 %v437
    %821 = vmatmul.mubr.f32.gmra.mrb[0].mxu0 %v390
    %v822 = vpop.f32.mrb[0].mxu0
    %v823 = vadd.f32 %v713, %v822
    %v824 = vpop.f32.mrb[0].mxu0
    %v825 = vadd.f32 %v717, %v824
    %826 = vmatprep.mubr.f32.mxu0 %v440
    %827 = vmatmul.mubr.f32.gmra.mrb[0].mxu0 %v391
    %v828 = vpop.f32.mrb[0].mxu0
    %v829 = vadd.f32 %v713, %v828
    %v830 = vpop.f32.mrb[0].mxu0
    %v831 = vadd.f32 %v717, %v830
    %832 = vdwg.mxu0
    %833 = vmatprep.subr.mxu0 %v613
    %834 = vmatpush1.msra.mxu0 %v612
    %835 = vmatprep.subr.mxu0 %v615
    %836 = vmatpush1.msra.mxu0 %v614
    %837 = vmatprep.subr.mxu0 %v617
    %838 = vmatpush1.msra.mxu0 %v616
    %839 = vmatprep.subr.mxu0 %v619
    %840 = vmatpush1.msra.mxu0 %v618
    %841 = vmatprep.subr.mxu0 %v621
    %842 = vmatpush1.msra.mxu0 %v620
    %843 = vmatprep.subr.mxu0 %v623
    %844 = vmatpush1.msra.mxu0 %v622
    %845 = vmatprep.subr.mxu0 %v625
    %846 = vmatpush1.msra.mxu0 %v624
    %847 = vmatprep.subr.mxu0 %v627
    %848 = vmatpush1.msra.mxu0 %v626
    %849 = vmatprep.subr.mxu0 %v629
    %850 = vmatpush1.msra.mxu0 %v628
    %851 = vmatprep.subr.mxu0 %v631
    %852 = vmatpush1.msra.mxu0 %v630
    %853 = vmatprep.subr.mxu0 %v633
    %854 = vmatpush1.msra.mxu0 %v632
    %855 = vmatprep.subr.mxu0 %v635
    %856 = vmatpush1.msra.mxu0 %v634
    %857 = vmatprep.subr.mxu0 %v637
    %858 = vmatpush1.msra.mxu0 %v636
    %859 = vmatprep.subr.mxu0 %v639
    %860 = vmatpush1.msra.mxu0 %v638
    %861 = vmatprep.subr.mxu0 %v641
    %862 = vmatpush1.msra.mxu0 %v640
    %863 = vmatprep.subr.mxu0 %v643
    %864 = vmatpush1.msra.mxu0 %v642
    %865 = vmatprep.subr.mxu0 %v645
    %866 = vmatpush1.msra.mxu0 %v644
    %867 = vmatprep.subr.mxu0 %v647
    %868 = vmatpush1.msra.mxu0 %v646
    %869 = vmatprep.subr.mxu0 %v649
    %870 = vmatpush1.msra.mxu0 %v648
    %871 = vmatprep.subr.mxu0 %v651
    %872 = vmatpush1.msra.mxu0 %v650
    %873 = vmatprep.subr.mxu0 %v653
    %874 = vmatpush1.msra.mxu0 %v652
    %875 = vmatprep.subr.mxu0 %v655
    %876 = vmatpush1.msra.mxu0 %v654
    %877 = vmatprep.subr.mxu0 %v657
    %878 = vmatpush1.msra.mxu0 %v656
    %879 = vmatprep.subr.mxu0 %v659
    %880 = vmatpush1.msra.mxu0 %v658
    %881 = vmatprep.subr.mxu0 %v661
    %882 = vmatpush1.msra.mxu0 %v660
    %883 = vmatprep.subr.mxu0 %v663
    %884 = vmatpush1.msra.mxu0 %v662
    %885 = vmatprep.subr.mxu0 %v665
    %886 = vmatpush1.msra.mxu0 %v664
    %887 = vmatprep.subr.mxu0 %v667
    %888 = vmatpush1.msra.mxu0 %v666
    %889 = vmatprep.subr.mxu0 %v669
    %890 = vmatpush1.msra.mxu0 %v668
    %891 = vmatprep.subr.mxu0 %v671
    %892 = vmatpush1.msra.mxu0 %v670
    %893 = vmatprep.subr.mxu0 %v673
    %894 = vmatpush1.msra.mxu0 %v672
    %895 = vmatprep.subr.mxu0 %v675
    %896 = vmatpush1.msra.mxu0 %v674
    %897 = vmatprep.mubr.f32.mxu0 %v485
    %898 = vmatmul.mubr.f32.gmra.mrb[0].mxu0 %v452
    %v899 = vpop.f32.mrb[0].mxu0
    %v900 = vadd.f32 %v787, %v899
    %v901 = vpop.f32.mrb[0].mxu0
    %v902 = vadd.f32 %v789, %v901
    %903 = vmatprep.mubr.f32.mxu0 %v488
    %904 = vmatmul.mubr.f32.gmra.mrb[0].mxu0 %v455
    %v905 = vpop.f32.mrb[0].mxu0
    %v906 = vadd.f32 %v793, %v905
    %v907 = vpop.f32.mrb[0].mxu0
    %v908 = vadd.f32 %v795, %v907
    %909 = vmatprep.mubr.f32.mxu0 %v491
    %910 = vmatmul.mubr.f32.gmra.mrb[0].mxu0 %v458
    %v911 = vpop.f32.mrb[0].mxu0
    %v912 = vadd.f32 %v799, %v911
    %v913 = vpop.f32.mrb[0].mxu0
    %v914 = vadd.f32 %v801, %v913
    %915 = vmatprep.mubr.f32.mxu0 %v494
    %916 = vmatmul.mubr.f32.gmra.mrb[0].mxu0 %v461
    %v917 = vpop.f32.mrb[0].mxu0
    %v918 = vadd.f32 %v805, %v917
    %v919 = vpop.f32.mrb[0].mxu0
    %v920 = vadd.f32 %v807, %v919
    %921 = vmatprep.mubr.f32.mxu0 %v497
    %922 = vmatmul.mubr.f32.gmra.mrb[0].mxu0 %v464
    %v923 = vpop.f32.mrb[0].mxu0
    %v924 = vadd.f32 %v811, %v923
    %v925 = vpop.f32.mrb[0].mxu0
    %v926 = vadd.f32 %v813, %v925
    %927 = vmatprep.mubr.f32.mxu0 %v500
    %928 = vmatmul.mubr.f32.gmra.mrb[0].mxu0 %v467
    %v929 = vpop.f32.mrb[0].mxu0
    %v930 = vadd.f32 %v817, %v929
    %v931 = vpop.f32.mrb[0].mxu0
    %v932 = vadd.f32 %v819, %v931
    %933 = vmatprep.mubr.f32.mxu0 %v503
    %934 = vmatmul.mubr.f32.gmra.mrb[0].mxu0 %v470
    %v935 = vpop.f32.mrb[0].mxu0
    %v936 = vadd.f32 %v823, %v935
    %v937 = vpop.f32.mrb[0].mxu0
    %v938 = vadd.f32 %v825, %v937
    %939 = vmatprep.mubr.f32.mxu0 %v506
    %940 = vmatmul.mubr.f32.gmra.mrb[0].mxu0 %v473
    %v941 = vpop.f32.mrb[0].mxu0
    %v942 = vadd.f32 %v829, %v941
    %v943 = vpop.f32.mrb[0].mxu0
    %v944 = vadd.f32 %v831, %v943
    %945 = vdwg.mxu0
    %946 = vmatprep.subr.mxu0 %v677
    %947 = vmatpush1.msra.mxu0 %v676
    %948 = vmatprep.subr.mxu0 %v679
    %949 = vmatpush1.msra.mxu0 %v678
    %950 = vmatprep.subr.mxu0 %v681
    %951 = vmatpush1.msra.mxu0 %v680
    %952 = vmatprep.subr.mxu0 %v683
    %953 = vmatpush1.msra.mxu0 %v682
    %954 = vmatprep.subr.mxu0 %v685
    %955 = vmatpush1.msra.mxu0 %v684
    %956 = vmatprep.subr.mxu0 %v687
    %957 = vmatpush1.msra.mxu0 %v686
    %958 = vmatprep.subr.mxu0 %v689
    %959 = vmatpush1.msra.mxu0 %v688
    %960 = vmatprep.subr.mxu0 %v691
    %961 = vmatpush1.msra.mxu0 %v690
    %962 = vmatprep.subr.mxu0 %v693
    %963 = vmatpush1.msra.mxu0 %v692
    %964 = vmatprep.subr.mxu0 %v695
    %965 = vmatpush1.msra.mxu0 %v694
    %966 = vmatprep.subr.mxu0 %v697
    %967 = vmatpush1.msra.mxu0 %v696
    %968 = vmatprep.subr.mxu0 %v699
    %969 = vmatpush1.msra.mxu0 %v698
    %970 = vmatprep.subr.mxu0 %v701
    %971 = vmatpush1.msra.mxu0 %v700
    %972 = vmatprep.subr.mxu0 %v703
    %973 = vmatpush1.msra.mxu0 %v702
    %974 = vmatprep.subr.mxu0 %v705
    %975 = vmatpush1.msra.mxu0 %v704
    %976 = vmatprep.subr.mxu0 %v707
    %977 = vmatpush1.msra.mxu0 %v706
    %978 = vmatprep.subr.mxu0 0.0
    %979 = vmatpush1.msra.mxu0 0.0
    %980 = vmatprep.subr.mxu0 0.0
    %981 = vmatpush1.msra.mxu0 0.0
    %982 = vmatprep.subr.mxu0 0.0
    %983 = vmatpush1.msra.mxu0 0.0
    %984 = vmatprep.subr.mxu0 0.0
    %985 = vmatpush1.msra.mxu0 0.0
    %986 = vmatprep.subr.mxu0 0.0
    %987 = vmatpush1.msra.mxu0 0.0
    %988 = vmatprep.subr.mxu0 0.0
    %989 = vmatpush1.msra.mxu0 0.0
    %990 = vmatprep.subr.mxu0 0.0
    %991 = vmatpush1.msra.mxu0 0.0
    %992 = vmatprep.subr.mxu0 0.0
    %993 = vmatpush1.msra.mxu0 0.0
    %994 = vmatprep.subr.mxu0 0.0
    %995 = vmatpush1.msra.mxu0 0.0
    %996 = vmatprep.subr.mxu0 0.0
    %997 = vmatpush1.msra.mxu0 0.0
    %998 = vmatprep.subr.mxu0 0.0
    %999 = vmatpush1.msra.mxu0 0.0
    %1000 = vmatprep.subr.mxu0 0.0
    %1001 = vmatpush1.msra.mxu0 0.0
    %1002 = vmatprep.subr.mxu0 0.0
    %1003 = vmatpush1.msra.mxu0 0.0
    %1004 = vmatprep.subr.mxu0 0.0
    %1005 = vmatpush1.msra.mxu0 0.0
    %1006 = vmatprep.subr.mxu0 0.0
    %1007 = vmatpush1.msra.mxu0 0.0
    %1008 = vmatprep.subr.mxu0 0.0
    %1009 = vmatpush1.msra.mxu0 0.0
    %1010 = vmatprep.mubr.f32.mxu0 0.0
    %1011 = vmatmul.mubr.f32.gmra.mrb[0].mxu0 %v518
    %v1012 = vpop.f32.mrb[0].mxu0
    %v1013 = vadd.f32 %v900, %v1012
    %v1014 = vpop.f32.mrb[0].mxu0
    %v1015 = vadd.f32 %v902, %v1014
    %1016 = vmatprep.mubr.f32.mxu0 0.0
    %1017 = vmatmul.mubr.f32.gmra.mrb[0].mxu0 %v521
    %v1018 = vpop.f32.mrb[0].mxu0
    %v1019 = vadd.f32 %v906, %v1018
    %v1020 = vpop.f32.mrb[0].mxu0
    %v1021 = vadd.f32 %v908, %v1020
    %1022 = vmatprep.mubr.f32.mxu0 0.0
    %1023 = vmatmul.mubr.f32.gmra.mrb[0].mxu0 %v524
    %v1024 = vpop.f32.mrb[0].mxu0
    %v1025 = vadd.f32 %v912, %v1024
    %v1026 = vpop.f32.mrb[0].mxu0
    %v1027 = vadd.f32 %v914, %v1026
    %1028 = vmatprep.mubr.f32.mxu0 0.0
    %1029 = vmatmul.mubr.f32.gmra.mrb[0].mxu0 %v527
    %v1030 = vpop.f32.mrb[0].mxu0
    %v1031 = vadd.f32 %v918, %v1030
    %v1032 = vpop.f32.mrb[0].mxu0
    %v1033 = vadd.f32 %v920, %v1032
    %1034 = vmatprep.mubr.f32.mxu0 0.0
    %1035 = vmatmul.mubr.f32.gmra.mrb[0].mxu0 %v530
    %v1036 = vpop.f32.mrb[0].mxu0
    %v1037 = vadd.f32 %v924, %v1036
    %v1038 = vpop.f32.mrb[0].mxu0
    %v1039 = vadd.f32 %v926, %v1038
    %1040 = vmatprep.mubr.f32.mxu0 0.0
    %1041 = vmatmul.mubr.f32.gmra.mrb[0].mxu0 %v533
    %v1042 = vpop.f32.mrb[0].mxu0
    %v1043 = vadd.f32 %v930, %v1042
    %v1044 = vpop.f32.mrb[0].mxu0
    %v1045 = vadd.f32 %v932, %v1044
    %1046 = vmatprep.mubr.f32.mxu0 0.0
    %1047 = vmatmul.mubr.f32.gmra.mrb[0].mxu0 %v536
    %v1048 = vpop.f32.mrb[0].mxu0
    %v1049 = vadd.f32 %v936, %v1048
    %v1050 = vpop.f32.mrb[0].mxu0
    %v1051 = vadd.f32 %v938, %v1050
    %1052 = vmatprep.mubr.f32.mxu0 0.0
    %1053 = vmatmul.mubr.f32.gmra.mrb[0].mxu0 %v539
    %v1054 = vpop.f32.mrb[0].mxu0
    %v1055 = vadd.f32 %v942, %v1054
    %v1056 = vpop.f32.mrb[0].mxu0
    %v1057 = vadd.f32 %v944, %v1056
    %1058 = vdwg.mxu0
    %v1059 = vmax.f32 %v1013, 0.0
    %v1060 = vmax.f32 %v1015, 0.0
    %v1061 = vmax.f32 %v1019, 0.0
    %v1062 = vmax.f32 %v1021, 0.0
    %v1063 = vmax.f32 %v1025, 0.0
    %v1064 = vmax.f32 %v1027, 0.0
    %v1065 = vmax.f32 %v1031, 0.0
    %v1066 = vmax.f32 %v1033, 0.0
    %v1067 = vmax.f32 %v1037, 0.0
    %v1068 = vmax.f32 %v1039, 0.0
    %v1069 = vmax.f32 %v1043, 0.0
    %v1070 = vmax.f32 %v1045, 0.0
    %v1071 = vmax.f32 %v1049, 0.0
    %v1072 = vmax.f32 %v1051, 0.0
    %v1073 = vmax.f32 %v1055, 0.0
    %v1074 = vmax.f32 %v1057, 0.0
    %v1075 = vmax.f32 %v1059, %v1060
    %v1076 = vmax.f32 %v1061, %v1062
    %v1077 = vmax.f32 %v1063, %v1064
    %v1078 = vmax.f32 %v1065, %v1066
    %v1079 = vmax.f32 %v1067, %v1068
    %v1080 = vmax.f32 %v1069, %v1070
    %v1081 = vmax.f32 %v1071, %v1072
    %v1082 = vmax.f32 %v1073, %v1074
    %v1091 = vcombine.high %v1075, %v1075
    %v1093 = vunpack.c.l.s4 1983009808
    %v1094 = vunpack.c.0.s8 %v1093
    %v1095 = vlaneseq
    %v1096 = vshrl.u32 %v1095, 7
    %v1097 = vsub.s32 %v1094, %v1096
    %v1098 = vrot.slane %v1075, %v1097
    %v1100 = vunpack.c.l.s4 1983009808
    %v1101 = vunpack.c.0.s8 %v1100
    %v1102 = vlaneseq
    %v1103 = vshrl.u32 %v1102, 7
    %v1104 = vsub.s32 %v1101, %v1103
    %v1105 = vrot.slane %v1091, %v1104
    %v1106 = vcombine.high %v1098, %v1098
    %v1107 = vcombine.high %v1105, %v1105
    %v1108 = vcombine.high %v1076, %v1076
    %v1110 = vunpack.c.l.s4 1983009808
    %v1111 = vunpack.c.0.s8 %v1110
    %v1112 = vlaneseq
    %v1113 = vshrl.u32 %v1112, 7
    %v1114 = vsub.s32 %v1111, %v1113
    %v1115 = vrot.slane %v1076, %v1114
    %v1117 = vunpack.c.l.s4 1983009808
    %v1118 = vunpack.c.0.s8 %v1117
    %v1119 = vlaneseq
    %v1120 = vshrl.u32 %v1119, 7
    %v1121 = vsub.s32 %v1118, %v1120
    %v1122 = vrot.slane %v1108, %v1121
    %v1123 = vcombine.high %v1115, %v1115
    %v1124 = vcombine.high %v1122, %v1122
    %v1125 = vcombine.high %v1077, %v1077
    %v1127 = vunpack.c.l.s4 1983009808
    %v1128 = vunpack.c.0.s8 %v1127
    %v1129 = vlaneseq
    %v1130 = vshrl.u32 %v1129, 7
    %v1131 = vsub.s32 %v1128, %v1130
    %v1132 = vrot.slane %v1077, %v1131
    %v1134 = vunpack.c.l.s4 1983009808
    %v1135 = vunpack.c.0.s8 %v1134
    %v1136 = vlaneseq
    %v1137 = vshrl.u32 %v1136, 7
    %v1138 = vsub.s32 %v1135, %v1137
    %v1139 = vrot.slane %v1125, %v1138
    %v1140 = vcombine.high %v1132, %v1132
    %v1141 = vcombine.high %v1139, %v1139
    %v1142 = vcombine.high %v1078, %v1078
    %v1144 = vunpack.c.l.s4 1983009808
    %v1145 = vunpack.c.0.s8 %v1144
    %v1146 = vlaneseq
    %v1147 = vshrl.u32 %v1146, 7
    %v1148 = vsub.s32 %v1145, %v1147
    %v1149 = vrot.slane %v1078, %v1148
    %v1151 = vunpack.c.l.s4 1983009808
    %v1152 = vunpack.c.0.s8 %v1151
    %v1153 = vlaneseq
    %v1154 = vshrl.u32 %v1153, 7
    %v1155 = vsub.s32 %v1152, %v1154
    %v1156 = vrot.slane %v1142, %v1155
    %v1157 = vcombine.high %v1149, %v1149
    %v1158 = vcombine.high %v1156, %v1156
    %v1159 = vcombine.high %v1079, %v1079
    %v1161 = vunpack.c.l.s4 1983009808
    %v1162 = vunpack.c.0.s8 %v1161
    %v1163 = vlaneseq
    %v1164 = vshrl.u32 %v1163, 7
    %v1165 = vsub.s32 %v1162, %v1164
    %v1166 = vrot.slane %v1079, %v1165
    %v1168 = vunpack.c.l.s4 1983009808
    %v1169 = vunpack.c.0.s8 %v1168
    %v1170 = vlaneseq
    %v1171 = vshrl.u32 %v1170, 7
    %v1172 = vsub.s32 %v1169, %v1171
    %v1173 = vrot.slane %v1159, %v1172
    %v1174 = vcombine.high %v1166, %v1166
    %v1175 = vcombine.high %v1173, %v1173
    %v1176 = vcombine.high %v1080, %v1080
    %v1178 = vunpack.c.l.s4 1983009808
    %v1179 = vunpack.c.0.s8 %v1178
    %v1180 = vlaneseq
    %v1181 = vshrl.u32 %v1180, 7
    %v1182 = vsub.s32 %v1179, %v1181
    %v1183 = vrot.slane %v1080, %v1182
    %v1185 = vunpack.c.l.s4 1983009808
    %v1186 = vunpack.c.0.s8 %v1185
    %v1187 = vlaneseq
    %v1188 = vshrl.u32 %v1187, 7
    %v1189 = vsub.s32 %v1186, %v1188
    %v1190 = vrot.slane %v1176, %v1189
    %v1191 = vcombine.high %v1183, %v1183
    %v1192 = vcombine.high %v1190, %v1190
    %v1193 = vcombine.high %v1081, %v1081
    %v1195 = vunpack.c.l.s4 1983009808
    %v1196 = vunpack.c.0.s8 %v1195
    %v1197 = vlaneseq
    %v1198 = vshrl.u32 %v1197, 7
    %v1199 = vsub.s32 %v1196, %v1198
    %v1200 = vrot.slane %v1081, %v1199
    %v1202 = vunpack.c.l.s4 1983009808
    %v1203 = vunpack.c.0.s8 %v1202
    %v1204 = vlaneseq
    %v1205 = vshrl.u32 %v1204, 7
    %v1206 = vsub.s32 %v1203, %v1205
    %v1207 = vrot.slane %v1193, %v1206
    %v1208 = vcombine.high %v1200, %v1200
    %v1209 = vcombine.high %v1207, %v1207
    %v1210 = vcombine.high %v1082, %v1082
    %v1212 = vunpack.c.l.s4 1983009808
    %v1213 = vunpack.c.0.s8 %v1212
    %v1214 = vlaneseq
    %v1215 = vshrl.u32 %v1214, 7
    %v1216 = vsub.s32 %v1213, %v1215
    %v1217 = vrot.slane %v1082, %v1216
    %v1219 = vunpack.c.l.s4 1983009808
    %v1220 = vunpack.c.0.s8 %v1219
    %v1221 = vlaneseq
    %v1222 = vshrl.u32 %v1221, 7
    %v1223 = vsub.s32 %v1220, %v1222
    %v1224 = vrot.slane %v1210, %v1223
    %v1225 = vcombine.high %v1217, %v1217
    %v1226 = vcombine.high %v1224, %v1224
    %v1259 = vrot.slane %v1098, 7
    %v1260 = vrot.slane %v1259, 2
    %v1261 = vrot.slane %v1106, 7
    %v1262 = vrot.slane %v1261, 2
    %v1263 = vrot.slane %v1105, 7
    %v1264 = vrot.slane %v1263, 2
    %v1265 = vrot.slane %v1107, 7
    %v1266 = vrot.slane %v1265, 2
    %v1267 = vrot.slane %v1115, 7
    %v1268 = vrot.slane %v1267, 2
    %v1269 = vrot.slane %v1123, 7
    %v1270 = vrot.slane %v1269, 2
    %v1271 = vrot.slane %v1122, 7
    %v1272 = vrot.slane %v1271, 2
    %v1273 = vrot.slane %v1124, 7
    %v1274 = vrot.slane %v1273, 2
    %v1275 = vrot.slane %v1132, 7
    %v1276 = vrot.slane %v1275, 2
    %v1277 = vrot.slane %v1140, 7
    %v1278 = vrot.slane %v1277, 2
    %v1279 = vrot.slane %v1139, 7
    %v1280 = vrot.slane %v1279, 2
    %v1281 = vrot.slane %v1141, 7
    %v1282 = vrot.slane %v1281, 2
    %v1283 = vrot.slane %v1149, 7
    %v1284 = vrot.slane %v1283, 2
    %v1285 = vrot.slane %v1157, 7
    %v1286 = vrot.slane %v1285, 2
    %v1287 = vrot.slane %v1156, 7
    %v1288 = vrot.slane %v1287, 2
    %v1289 = vrot.slane %v1158, 7
    %v1290 = vrot.slane %v1289, 2
    %v1291 = vrot.slane %v1166, 7
    %v1292 = vrot.slane %v1291, 2
    %v1293 = vrot.slane %v1174, 7
    %v1294 = vrot.slane %v1293, 2
    %v1295 = vrot.slane %v1173, 7
    %v1296 = vrot.slane %v1295, 2
    %v1297 = vrot.slane %v1175, 7
    %v1298 = vrot.slane %v1297, 2
    %v1299 = vrot.slane %v1183, 7
    %v1300 = vrot.slane %v1299, 2
    %v1301 = vrot.slane %v1191, 7
    %v1302 = vrot.slane %v1301, 2
    %v1303 = vrot.slane %v1190, 7
    %v1304 = vrot.slane %v1303, 2
    %v1305 = vrot.slane %v1192, 7
    %v1306 = vrot.slane %v1305, 2
    %v1307 = vrot.slane %v1200, 7
    %v1308 = vrot.slane %v1307, 2
    %v1309 = vrot.slane %v1208, 7
    %v1310 = vrot.slane %v1309, 2
    %v1311 = vrot.slane %v1207, 7
    %v1312 = vrot.slane %v1311, 2
    %v1313 = vrot.slane %v1209, 7
    %v1314 = vrot.slane %v1313, 2
    %v1315 = vrot.slane %v1217, 7
    %v1316 = vrot.slane %v1315, 2
    %v1317 = vrot.slane %v1225, 7
    %v1318 = vrot.slane %v1317, 2
    %v1319 = vrot.slane %v1224, 7
    %v1320 = vrot.slane %v1319, 2
    %v1321 = vrot.slane %v1226, 7
    %v1322 = vrot.slane %v1321, 2
    %v1355 = vmax.f32 %v1098, %v1260
    %v1356 = vmax.f32 %v1106, %v1262
    %v1357 = vmax.f32 %v1105, %v1264
    %v1358 = vmax.f32 %v1107, %v1266
    %v1359 = vmax.f32 %v1115, %v1268
    %v1360 = vmax.f32 %v1123, %v1270
    %v1361 = vmax.f32 %v1122, %v1272
    %v1362 = vmax.f32 %v1124, %v1274
    %v1363 = vmax.f32 %v1132, %v1276
    %v1364 = vmax.f32 %v1140, %v1278
    %v1365 = vmax.f32 %v1139, %v1280
    %v1366 = vmax.f32 %v1141, %v1282
    %v1367 = vmax.f32 %v1149, %v1284
    %v1368 = vmax.f32 %v1157, %v1286
    %v1369 = vmax.f32 %v1156, %v1288
    %v1370 = vmax.f32 %v1158, %v1290
    %v1371 = vmax.f32 %v1166, %v1292
    %v1372 = vmax.f32 %v1174, %v1294
    %v1373 = vmax.f32 %v1173, %v1296
    %v1374 = vmax.f32 %v1175, %v1298
    %v1375 = vmax.f32 %v1183, %v1300
    %v1376 = vmax.f32 %v1191, %v1302
    %v1377 = vmax.f32 %v1190, %v1304
    %v1378 = vmax.f32 %v1192, %v1306
    %v1379 = vmax.f32 %v1200, %v1308
    %v1380 = vmax.f32 %v1208, %v1310
    %v1381 = vmax.f32 %v1207, %v1312
    %v1382 = vmax.f32 %v1209, %v1314
    %v1383 = vmax.f32 %v1217, %v1316
    %v1384 = vmax.f32 %v1225, %v1318
    %v1385 = vmax.f32 %v1224, %v1320
    %v1386 = vmax.f32 %v1226, %v1322
    %vm1419 = vcmask 1044484
    %v1420 = vsel %vm1419, %v1355, %v1355
    %vm1421 = vcmask 1046534
    %v1422 = vsel %vm1421, %v1355, %v1420
    %v1423 = vrot.slane %v1356, 7
    %vm1424 = vcmask 1041409
    %v1425 = vsel %vm1424, %v1423, %v1422
    %vm1426 = vcmask 1043459
    %v1427 = vsel %vm1426, %v1423, %v1425
    %vm1428 = vcmask 1045509
    %v1429 = vsel %vm1428, %v1423, %v1427
    %vm1430 = vcmask 1047559
    %v1431 = vsel %vm1430, %v1423, %v1429
    %v1432 = vsel %vm1419, %v1357, %v1357
    %v1433 = vsel %vm1421, %v1357, %v1432
    %v1434 = vrot.slane %v1358, 7
    %v1435 = vsel %vm1424, %v1434, %v1433
    %v1436 = vsel %vm1426, %v1434, %v1435
    %v1437 = vsel %vm1428, %v1434, %v1436
    %v1438 = vsel %vm1430, %v1434, %v1437
    %v1439 = vsel %vm1419, %v1359, %v1359
    %v1440 = vsel %vm1421, %v1359, %v1439
    %v1441 = vrot.slane %v1360, 7
    %v1442 = vsel %vm1424, %v1441, %v1440
    %v1443 = vsel %vm1426, %v1441, %v1442
    %v1444 = vsel %vm1428, %v1441, %v1443
    %v1445 = vsel %vm1430, %v1441, %v1444
    %v1446 = vsel %vm1419, %v1361, %v1361
    %v1447 = vsel %vm1421, %v1361, %v1446
    %v1448 = vrot.slane %v1362, 7
    %v1449 = vsel %vm1424, %v1448, %v1447
    %v1450 = vsel %vm1426, %v1448, %v1449
    %v1451 = vsel %vm1428, %v1448, %v1450
    %v1452 = vsel %vm1430, %v1448, %v1451
    %v1453 = vsel %vm1419, %v1363, %v1363
    %v1454 = vsel %vm1421, %v1363, %v1453
    %v1455 = vrot.slane %v1364, 7
    %v1456 = vsel %vm1424, %v1455, %v1454
    %v1457 = vsel %vm1426, %v1455, %v1456
    %v1458 = vsel %vm1428, %v1455, %v1457
    %v1459 = vsel %vm1430, %v1455, %v1458
    %v1460 = vsel %vm1419, %v1365, %v1365
    %v1461 = vsel %vm1421, %v1365, %v1460
    %v1462 = vrot.slane %v1366, 7
    %v1463 = vsel %vm1424, %v1462, %v1461
    %v1464 = vsel %vm1426, %v1462, %v1463
    %v1465 = vsel %vm1428, %v1462, %v1464
    %v1466 = vsel %vm1430, %v1462, %v1465
    %v1467 = vsel %vm1419, %v1367, %v1367
    %v1468 = vsel %vm1421, %v1367, %v1467
    %v1469 = vrot.slane %v1368, 7
    %v1470 = vsel %vm1424, %v1469, %v1468
    %v1471 = vsel %vm1426, %v1469, %v1470
    %v1472 = vsel %vm1428, %v1469, %v1471
    %v1473 = vsel %vm1430, %v1469, %v1472
    %v1474 = vsel %vm1419, %v1369, %v1369
    %v1475 = vsel %vm1421, %v1369, %v1474
    %v1476 = vrot.slane %v1370, 7
    %v1477 = vsel %vm1424, %v1476, %v1475
    %v1478 = vsel %vm1426, %v1476, %v1477
    %v1479 = vsel %vm1428, %v1476, %v1478
    %v1480 = vsel %vm1430, %v1476, %v1479
    %v1481 = vsel %vm1419, %v1371, %v1371
    %v1482 = vsel %vm1421, %v1371, %v1481
    %v1483 = vrot.slane %v1372, 7
    %v1484 = vsel %vm1424, %v1483, %v1482
    %v1485 = vsel %vm1426, %v1483, %v1484
    %v1486 = vsel %vm1428, %v1483, %v1485
    %v1487 = vsel %vm1430, %v1483, %v1486
    %v1488 = vsel %vm1419, %v1373, %v1373
    %v1489 = vsel %vm1421, %v1373, %v1488
    %v1490 = vrot.slane %v1374, 7
    %v1491 = vsel %vm1424, %v1490, %v1489
    %v1492 = vsel %vm1426, %v1490, %v1491
    %v1493 = vsel %vm1428, %v1490, %v1492
    %v1494 = vsel %vm1430, %v1490, %v1493
    %v1495 = vsel %vm1419, %v1375, %v1375
    %v1496 = vsel %vm1421, %v1375, %v1495
    %v1497 = vrot.slane %v1376, 7
    %v1498 = vsel %vm1424, %v1497, %v1496
    %v1499 = vsel %vm1426, %v1497, %v1498
    %v1500 = vsel %vm1428, %v1497, %v1499
    %v1501 = vsel %vm1430, %v1497, %v1500
    %v1502 = vsel %vm1419, %v1377, %v1377
    %v1503 = vsel %vm1421, %v1377, %v1502
    %v1504 = vrot.slane %v1378, 7
    %v1505 = vsel %vm1424, %v1504, %v1503
    %v1506 = vsel %vm1426, %v1504, %v1505
    %v1507 = vsel %vm1428, %v1504, %v1506
    %v1508 = vsel %vm1430, %v1504, %v1507
    %v1509 = vsel %vm1419, %v1379, %v1379
    %v1510 = vsel %vm1421, %v1379, %v1509
    %v1511 = vrot.slane %v1380, 7
    %v1512 = vsel %vm1424, %v1511, %v1510
    %v1513 = vsel %vm1426, %v1511, %v1512
    %v1514 = vsel %vm1428, %v1511, %v1513
    %v1515 = vsel %vm1430, %v1511, %v1514
    %v1516 = vsel %vm1419, %v1381, %v1381
    %v1517 = vsel %vm1421, %v1381, %v1516
    %v1518 = vrot.slane %v1382, 7
    %v1519 = vsel %vm1424, %v1518, %v1517
    %v1520 = vsel %vm1426, %v1518, %v1519
    %v1521 = vsel %vm1428, %v1518, %v1520
    %v1522 = vsel %vm1430, %v1518, %v1521
    %v1523 = vsel %vm1419, %v1383, %v1383
    %v1524 = vsel %vm1421, %v1383, %v1523
    %v1525 = vrot.slane %v1384, 7
    %v1526 = vsel %vm1424, %v1525, %v1524
    %v1527 = vsel %vm1426, %v1525, %v1526
    %v1528 = vsel %vm1428, %v1525, %v1527
    %v1529 = vsel %vm1430, %v1525, %v1528
    %v1530 = vsel %vm1419, %v1385, %v1385
    %v1531 = vsel %vm1421, %v1385, %v1530
    %v1532 = vrot.slane %v1386, 7
    %v1533 = vsel %vm1424, %v1532, %v1531
    %v1534 = vsel %vm1426, %v1532, %v1533
    %v1535 = vsel %vm1428, %v1532, %v1534
    %v1536 = vsel %vm1430, %v1532, %v1535
    %v1553 = vcombine.low %v1431, %v1445
    %v1555 = vunpack.c.l.s4 1934713408
    %v1556 = vunpack.c.0.s8 %v1555
    %v1557 = vlaneseq
    %v1558 = vshrl.u32 %v1557, 7
    %v1559 = vsub.s32 %v1556, %v1558
    %v1560 = vrot.slane %v1553, %v1559
    %v1561 = vcombine.high %v1560, 0.0
    %v1562 = vcombine.low %v1459, %v1473
    %v1564 = vunpack.c.l.s4 1934713408
    %v1565 = vunpack.c.0.s8 %v1564
    %v1566 = vlaneseq
    %v1567 = vshrl.u32 %v1566, 7
    %v1568 = vsub.s32 %v1565, %v1567
    %v1569 = vrot.slane %v1562, %v1568
    %v1570 = vcombine.high %v1569, 0.0
    %v1571 = vcombine.low %v1487, %v1501
    %v1573 = vunpack.c.l.s4 1934713408
    %v1574 = vunpack.c.0.s8 %v1573
    %v1575 = vlaneseq
    %v1576 = vshrl.u32 %v1575, 7
    %v1577 = vsub.s32 %v1574, %v1576
    %v1578 = vrot.slane %v1571, %v1577
    %v1579 = vcombine.high %v1578, 0.0
    %v1580 = vcombine.low %v1515, %v1529
    %v1582 = vunpack.c.l.s4 1934713408
    %v1583 = vunpack.c.0.s8 %v1582
    %v1584 = vlaneseq
    %v1585 = vshrl.u32 %v1584, 7
    %v1586 = vsub.s32 %v1583, %v1585
    %v1587 = vrot.slane %v1580, %v1586
    %v1588 = vcombine.high %v1587, 0.0
    %v1589 = vcombine.low %v1438, %v1452
    %v1591 = vunpack.c.l.s4 1934713408
    %v1592 = vunpack.c.0.s8 %v1591
    %v1593 = vlaneseq
    %v1594 = vshrl.u32 %v1593, 7
    %v1595 = vsub.s32 %v1592, %v1594
    %v1596 = vrot.slane %v1589, %v1595
    %v1597 = vcombine.high %v1596, 0.0
    %v1598 = vcombine.low %v1466, %v1480
    %v1600 = vunpack.c.l.s4 1934713408
    %v1601 = vunpack.c.0.s8 %v1600
    %v1602 = vlaneseq
    %v1603 = vshrl.u32 %v1602, 7
    %v1604 = vsub.s32 %v1601, %v1603
    %v1605 = vrot.slane %v1598, %v1604
    %v1606 = vcombine.high %v1605, 0.0
    %v1607 = vcombine.low %v1494, %v1508
    %v1609 = vunpack.c.l.s4 1934713408
    %v1610 = vunpack.c.0.s8 %v1609
    %v1611 = vlaneseq
    %v1612 = vshrl.u32 %v1611, 7
    %v1613 = vsub.s32 %v1610, %v1612
    %v1614 = vrot.slane %v1607, %v1613
    %v1615 = vcombine.high %v1614, 0.0
    %v1616 = vcombine.low %v1522, %v1536
    %v1618 = vunpack.c.l.s4 1934713408
    %v1619 = vunpack.c.0.s8 %v1618
    %v1620 = vlaneseq
    %v1621 = vshrl.u32 %v1620, 7
    %v1622 = vsub.s32 %v1619, %v1621
    %v1623 = vrot.slane %v1616, %v1622
    %v1624 = vcombine.high %v1623, 0.0
    %v1629 = vcombine.low %v1560, %v1569
    %v1630 = vcombine.low %v1578, %v1587
    %v1632 = vunpack.c.l.s4 1983009808
    %v1633 = vunpack.c.0.s8 %v1632
    %v1634 = vlaneseq
    %v1635 = vshrl.u32 %v1634, 7
    %v1636 = vsub.s32 %v1633, %v1635
    %v1637 = vrot.slane %v1629, %v1636
    %v1639 = vunpack.c.l.s4 1983009808
    %v1640 = vunpack.c.0.s8 %v1639
    %v1641 = vlaneseq
    %v1642 = vshrl.u32 %v1641, 7
    %v1643 = vsub.s32 %v1640, %v1642
    %v1644 = vrot.slane %v1630, %v1643
    %v1645 = vcombine.low %v1637, %v1644
    %v1651 = vcombine.low %v1561, %v1570
    %v1652 = vcombine.low %v1579, %v1588
    %v1654 = vunpack.c.l.s4 1983009808
    %v1655 = vunpack.c.0.s8 %v1654
    %v1656 = vlaneseq
    %v1657 = vshrl.u32 %v1656, 7
    %v1658 = vsub.s32 %v1655, %v1657
    %v1659 = vrot.slane %v1651, %v1658
    %v1661 = vunpack.c.l.s4 1983009808
    %v1662 = vunpack.c.0.s8 %v1661
    %v1663 = vlaneseq
    %v1664 = vshrl.u32 %v1663, 7
    %v1665 = vsub.s32 %v1662, %v1664
    %v1666 = vrot.slane %v1652, %v1665
    %v1667 = vcombine.low %v1659, %v1666
    %v1673 = vcombine.low %v1596, %v1605
    %v1674 = vcombine.low %v1614, %v1623
    %v1676 = vunpack.c.l.s4 1983009808
    %v1677 = vunpack.c.0.s8 %v1676
    %v1678 = vlaneseq
    %v1679 = vshrl.u32 %v1678, 7
    %v1680 = vsub.s32 %v1677, %v1679
    %v1681 = vrot.slane %v1673, %v1680
    %v1683 = vunpack.c.l.s4 1983009808
    %v1684 = vunpack.c.0.s8 %v1683
    %v1685 = vlaneseq
    %v1686 = vshrl.u32 %v1685, 7
    %v1687 = vsub.s32 %v1684, %v1686
    %v1688 = vrot.slane %v1674, %v1687
    %v1689 = vcombine.low %v1681, %v1688
    %v1695 = vcombine.low %v1597, %v1606
    %v1696 = vcombine.low %v1615, %v1624
    %v1698 = vunpack.c.l.s4 1983009808
    %v1699 = vunpack.c.0.s8 %v1698
    %v1700 = vlaneseq
    %v1701 = vshrl.u32 %v1700, 7
    %v1702 = vsub.s32 %v1699, %v1701
    %v1703 = vrot.slane %v1695, %v1702
    %v1705 = vunpack.c.l.s4 1983009808
    %v1706 = vunpack.c.0.s8 %v1705
    %v1707 = vlaneseq
    %v1708 = vshrl.u32 %v1707, 7
    %v1709 = vsub.s32 %v1706, %v1708
    %v1710 = vrot.slane %v1696, %v1709
    %v1711 = vcombine.low %v1703, %v1710
    %v1713 = vld [vmem:[#allocation8] sm:$0xff]
    %v1714 = vld [vmem:[#allocation8 + $0x8] sm:$0xff]
    %v1715 = vld [vmem:[#allocation8 + $0x10] sm:$0xff]
    %v1716 = vld [vmem:[#allocation8 + $0x18] sm:$0xff]
    %v1717 = vld [vmem:[#allocation8 + $0x20] sm:$0xff]
    %v1718 = vld [vmem:[#allocation8 + $0x28] sm:$0xff]
    %v1719 = vld [vmem:[#allocation8 + $0x30] sm:$0xff]
    %v1720 = vld [vmem:[#allocation8 + $0x38] sm:$0xff]
    %v1721 = vld [vmem:[#allocation8 + $0x40] sm:$0xff]
    %v1722 = vld [vmem:[#allocation8 + $0x48] sm:$0xff]
    %v1723 = vld [vmem:[#allocation8 + $0x50] sm:$0xff]
    %v1724 = vld [vmem:[#allocation8 + $0x58] sm:$0xff]
    %v1725 = vld [vmem:[#allocation8 + $0x60] sm:$0xff]
    %v1726 = vld [vmem:[#allocation8 + $0x68] sm:$0xff]
    %v1727 = vld [vmem:[#allocation8 + $0x70] sm:$0xff]
    %v1728 = vld [vmem:[#allocation8 + $0x78] sm:$0xff]
    %v1729 = vld [vmem:[#allocation8 + $0x80] sm:$0xff]
    %v1730 = vld [vmem:[#allocation8 + $0x88] sm:$0xff]
    %v1731 = vld [vmem:[#allocation8 + $0x90] sm:$0xff]
    %v1732 = vld [vmem:[#allocation8 + $0x98] sm:$0xff]
    %v1733 = vld [vmem:[#allocation8 + $0xa0] sm:$0xff]
    %v1734 = vld [vmem:[#allocation8 + $0xa8] sm:$0xff]
    %v1735 = vld [vmem:[#allocation8 + $0xb0] sm:$0xff]
    %v1736 = vld [vmem:[#allocation8 + $0xb8] sm:$0xff]
    %v1737 = vld [vmem:[#allocation8 + $0xc0] sm:$0xff]
    %v1738 = vld [vmem:[#allocation8 + $0xc8] sm:$0xff]
    %v1739 = vld [vmem:[#allocation8 + $0xd0] sm:$0xff]
    %v1740 = vld [vmem:[#allocation8 + $0xd8] sm:$0xff]
    %v1741 = vld [vmem:[#allocation8 + $0xe0] sm:$0xff]
    %v1742 = vld [vmem:[#allocation8 + $0xe8] sm:$0xff]
    %v1743 = vld [vmem:[#allocation8 + $0xf0] sm:$0xff]
    %v1744 = vld [vmem:[#allocation8 + $0xf8] sm:$0xff]
    %v1745 = vld [vmem:[#allocation8 + $0x100] sm:$0xff]
    %v1746 = vld [vmem:[#allocation8 + $0x108] sm:$0xff]
    %v1747 = vld [vmem:[#allocation8 + $0x110] sm:$0xff]
    %v1748 = vld [vmem:[#allocation8 + $0x118] sm:$0xff]
    %v1749 = vld [vmem:[#allocation8 + $0x120] sm:$0xff]
    %v1750 = vld [vmem:[#allocation8 + $0x128] sm:$0xff]
    %v1751 = vld [vmem:[#allocation8 + $0x130] sm:$0xff]
    %v1752 = vld [vmem:[#allocation8 + $0x138] sm:$0xff]
    %v1753 = vld [vmem:[#allocation8 + $0x140] sm:$0xff]
    %v1754 = vld [vmem:[#allocation8 + $0x148] sm:$0xff]
    %v1755 = vld [vmem:[#allocation8 + $0x150] sm:$0xff]
    %v1756 = vld [vmem:[#allocation8 + $0x158] sm:$0xff]
    %v1757 = vld [vmem:[#allocation8 + $0x160] sm:$0xff]
    %v1758 = vld [vmem:[#allocation8 + $0x168] sm:$0xff]
    %v1759 = vld [vmem:[#allocation8 + $0x170] sm:$0xff]
    %v1760 = vld [vmem:[#allocation8 + $0x178] sm:$0xff]
    %v1761 = vld [vmem:[#allocation8 + $0x180] sm:$0xff]
    %v1762 = vld [vmem:[#allocation8 + $0x188] sm:$0xff]
    %v1763 = vld [vmem:[#allocation8 + $0x190] sm:$0xff]
    %v1764 = vld [vmem:[#allocation8 + $0x198] sm:$0xff]
    %v1765 = vld [vmem:[#allocation8 + $0x1a0] sm:$0xff]
    %v1766 = vld [vmem:[#allocation8 + $0x1a8] sm:$0xff]
    %v1767 = vld [vmem:[#allocation8 + $0x1b0] sm:$0xff]
    %v1768 = vld [vmem:[#allocation8 + $0x1b8] sm:$0xff]
    %v1769 = vld [vmem:[#allocation8 + $0x1c0] sm:$0xff]
    %v1770 = vld [vmem:[#allocation8 + $0x1c8] sm:$0xff]
    %v1771 = vld [vmem:[#allocation8 + $0x1d0] sm:$0xff]
    %v1772 = vld [vmem:[#allocation8 + $0x1d8] sm:$0xff]
    %v1773 = vld [vmem:[#allocation8 + $0x1e0] sm:$0xff]
    %v1774 = vld [vmem:[#allocation8 + $0x1e8] sm:$0xff]
    %v1775 = vld [vmem:[#allocation8 + $0x1f0] sm:$0xff]
    %v1776 = vld [vmem:[#allocation8 + $0x1f8] sm:$0xff]
    %v1777 = vld [vmem:[%s6] sm:$0x1]
    %v1779 = vlaneseq
    %v1780 = vshrl.u32 %v1779, 7
    %v1781 = vsub.s32 0, %v1780
    %v1782 = vrot.slane %v1777, %v1781
    %1784 = vmatprep.subr.mxu0 0.0
    %1785 = vmatpush1.msra.mxu0 %v1713
    %1786 = vmatprep.subr.mxu0 0.0
    %1787 = vmatpush1.msra.mxu0 %v1714
    %1788 = vmatprep.subr.mxu0 0.0
    %1789 = vmatpush1.msra.mxu0 %v1715
    %1790 = vmatprep.subr.mxu0 0.0
    %1791 = vmatpush1.msra.mxu0 %v1716
    %1792 = vmatprep.subr.mxu0 0.0
    %1793 = vmatpush1.msra.mxu0 %v1717
    %1794 = vmatprep.subr.mxu0 0.0
    %1795 = vmatpush1.msra.mxu0 %v1718
    %1796 = vmatprep.subr.mxu0 0.0
    %1797 = vmatpush1.msra.mxu0 %v1719
    %1798 = vmatprep.subr.mxu0 0.0
    %1799 = vmatpush1.msra.mxu0 %v1720
    %1800 = vmatprep.subr.mxu0 0.0
    %1801 = vmatpush1.msra.mxu0 %v1721
    %1802 = vmatprep.subr.mxu0 0.0
    %1803 = vmatpush1.msra.mxu0 %v1722
    %1804 = vmatprep.subr.mxu0 0.0
    %1805 = vmatpush1.msra.mxu0 %v1723
    %1806 = vmatprep.subr.mxu0 0.0
    %1807 = vmatpush1.msra.mxu0 %v1724
    %1808 = vmatprep.subr.mxu0 0.0
    %1809 = vmatpush1.msra.mxu0 %v1725
    %1810 = vmatprep.subr.mxu0 0.0
    %1811 = vmatpush1.msra.mxu0 %v1726
    %1812 = vmatprep.subr.mxu0 0.0
    %1813 = vmatpush1.msra.mxu0 %v1727
    %1814 = vmatprep.subr.mxu0 0.0
    %1815 = vmatpush1.msra.mxu0 %v1728
    %1816 = vmatprep.subr.mxu0 0.0
    %1817 = vmatpush1.msra.mxu0 %v1729
    %1818 = vmatprep.subr.mxu0 0.0
    %1819 = vmatpush1.msra.mxu0 %v1730
    %1820 = vmatprep.subr.mxu0 0.0
    %1821 = vmatpush1.msra.mxu0 %v1731
    %1822 = vmatprep.subr.mxu0 0.0
    %1823 = vmatpush1.msra.mxu0 %v1732
    %1824 = vmatprep.subr.mxu0 0.0
    %1825 = vmatpush1.msra.mxu0 %v1733
    %1826 = vmatprep.subr.mxu0 0.0
    %1827 = vmatpush1.msra.mxu0 %v1734
    %1828 = vmatprep.subr.mxu0 0.0
    %1829 = vmatpush1.msra.mxu0 %v1735
    %1830 = vmatprep.subr.mxu0 0.0
    %1831 = vmatpush1.msra.mxu0 %v1736
    %1832 = vmatprep.subr.mxu0 0.0
    %1833 = vmatpush1.msra.mxu0 %v1737
    %1834 = vmatprep.subr.mxu0 0.0
    %1835 = vmatpush1.msra.mxu0 %v1738
    %1836 = vmatprep.subr.mxu0 0.0
    %1837 = vmatpush1.msra.mxu0 %v1739
    %1838 = vmatprep.subr.mxu0 0.0
    %1839 = vmatpush1.msra.mxu0 %v1740
    %1840 = vmatprep.subr.mxu0 0.0
    %1841 = vmatpush1.msra.mxu0 %v1741
    %1842 = vmatprep.subr.mxu0 0.0
    %1843 = vmatpush1.msra.mxu0 %v1742
    %1844 = vmatprep.subr.mxu0 0.0
    %1845 = vmatpush1.msra.mxu0 %v1743
    %1846 = vmatprep.subr.mxu0 0.0
    %1847 = vmatpush1.msra.mxu0 %v1744
    %1848 = vmatprep.mubr.f32.mxu0 %v1667
    %1849 = vmatmul.mubr.f32.gmra.mrb[0].mxu0 %v1645
    %v1850 = vpop.f32.mrb[0].mxu0
    %v1851 = vadd.f32 %v1782, %v1850
    %v1852 = vpop.f32.mrb[0].mxu0
    %1853 = vdwg.mxu0
    %1854 = vmatprep.subr.mxu0 0.0
    %1855 = vmatpush1.msra.mxu0 %v1745
    %1856 = vmatprep.subr.mxu0 0.0
    %1857 = vmatpush1.msra.mxu0 %v1746
    %1858 = vmatprep.subr.mxu0 0.0
    %1859 = vmatpush1.msra.mxu0 %v1747
    %1860 = vmatprep.subr.mxu0 0.0
    %1861 = vmatpush1.msra.mxu0 %v1748
    %1862 = vmatprep.subr.mxu0 0.0
    %1863 = vmatpush1.msra.mxu0 %v1749
    %1864 = vmatprep.subr.mxu0 0.0
    %1865 = vmatpush1.msra.mxu0 %v1750
    %1866 = vmatprep.subr.mxu0 0.0
    %1867 = vmatpush1.msra.mxu0 %v1751
    %1868 = vmatprep.subr.mxu0 0.0
    %1869 = vmatpush1.msra.mxu0 %v1752
    %1870 = vmatprep.subr.mxu0 0.0
    %1871 = vmatpush1.msra.mxu0 %v1753
    %1872 = vmatprep.subr.mxu0 0.0
    %1873 = vmatpush1.msra.mxu0 %v1754
    %1874 = vmatprep.subr.mxu0 0.0
    %1875 = vmatpush1.msra.mxu0 %v1755
    %1876 = vmatprep.subr.mxu0 0.0
    %1877 = vmatpush1.msra.mxu0 %v1756
    %1878 = vmatprep.subr.mxu0 0.0
    %1879 = vmatpush1.msra.mxu0 %v1757
    %1880 = vmatprep.subr.mxu0 0.0
    %1881 = vmatpush1.msra.mxu0 %v1758
    %1882 = vmatprep.subr.mxu0 0.0
    %1883 = vmatpush1.msra.mxu0 %v1759
    %1884 = vmatprep.subr.mxu0 0.0
    %1885 = vmatpush1.msra.mxu0 %v1760
    %1886 = vmatprep.subr.mxu0 0.0
    %1887 = vmatpush1.msra.mxu0 %v1761
    %1888 = vmatprep.subr.mxu0 0.0
    %1889 = vmatpush1.msra.mxu0 %v1762
    %1890 = vmatprep.subr.mxu0 0.0
    %1891 = vmatpush1.msra.mxu0 %v1763
    %1892 = vmatprep.subr.mxu0 0.0
    %1893 = vmatpush1.msra.mxu0 %v1764
    %1894 = vmatprep.subr.mxu0 0.0
    %1895 = vmatpush1.msra.mxu0 %v1765
    %1896 = vmatprep.subr.mxu0 0.0
    %1897 = vmatpush1.msra.mxu0 %v1766
    %1898 = vmatprep.subr.mxu0 0.0
    %1899 = vmatpush1.msra.mxu0 %v1767
    %1900 = vmatprep.subr.mxu0 0.0
    %1901 = vmatpush1.msra.mxu0 %v1768
    %1902 = vmatprep.subr.mxu0 0.0
    %1903 = vmatpush1.msra.mxu0 %v1769
    %1904 = vmatprep.subr.mxu0 0.0
    %1905 = vmatpush1.msra.mxu0 %v1770
    %1906 = vmatprep.subr.mxu0 0.0
    %1907 = vmatpush1.msra.mxu0 %v1771
    %1908 = vmatprep.subr.mxu0 0.0
    %1909 = vmatpush1.msra.mxu0 %v1772
    %1910 = vmatprep.subr.mxu0 0.0
    %1911 = vmatpush1.msra.mxu0 %v1773
    %1912 = vmatprep.subr.mxu0 0.0
    %1913 = vmatpush1.msra.mxu0 %v1774
    %1914 = vmatprep.subr.mxu0 0.0
    %1915 = vmatpush1.msra.mxu0 %v1775
    %1916 = vmatprep.subr.mxu0 0.0
    %1917 = vmatpush1.msra.mxu0 %v1776
    %1918 = vmatprep.mubr.f32.mxu0 %v1711
    %1919 = vmatmul.mubr.f32.gmra.mrb[0].mxu0 %v1689
    %v1920 = vpop.f32.mrb[0].mxu0
    %v1921 = vadd.f32 %v1851, %v1920
    %v1922 = vpop.f32.mrb[0].mxu0
    %1923 = vdwg.mxu0
    %1924 = vst [vmem:[#allocation10] sm:$0xff] %v1921
    // Predicated region
    $region46: #{tpu_custom_call.1} parent=1 // pred_check
      _
    $region47: #{tpu_custom_call.1} parent=1 // pred_check_branch
      %1926 = sbr.rel (0) target = $region49
    $region48: #{tpu_custom_call.1} parent=1 // pred_region
      %s1928 = ssub.s32 128, 128
      %1929 = vsyncadd [#allocation4], %s1928
      %s1931 = sshll.u32 [#allocation10], 4
      %s1932 = int_to_ptr.vmem [resolvable:$true] %s1931
      %1934 = dma.vmem_to_hbm [thread:$0]  %s1932, 128, %s7, [#allocation4]
    $region49: #{tpu_custom_call.1} parent=1 // pred_fallthru
      _
    // Predicated region
    $region50: #{tpu_custom_call.1} parent=1 // pred_check
      _
    $region51: #{tpu_custom_call.1} parent=1 // pred_check_branch
      %1936 = sbr.rel (0) target = $region53
    $region52: #{tpu_custom_call.1} parent=1 // pred_region
      %1937 = dma.done [#allocation4], 128
    $region53: #{tpu_custom_call.1} parent=1 // pred_fallthru
      _
    %1938 = vsyncpa [#allocation3], 1
    %1939 = vsyncpa [#allocation6], 1
    %1940 = vsyncpa [#allocation9], 1
    %1941 = vsyncpa [#allocation4], 1

</llo_original>
